<compile_context>
chip_gen: v5e
topology: v5e:2x2
jax: 0.10.0
libtpu: 0.0.40
codegen_flags: <defaults>
</compile_context>

<pallas_src>
import jax
import jax.numpy as jnp
from jax.experimental import pallas as pl
from jax.experimental.pallas import tpu as pltpu

EPS = 1e-5          # nn.BatchNorm1d default eps
NEG_SLOPE = 0.01    # nn.LeakyReLU default negative_slope
NEG_INF = -1e30     # f32 bias for padded class lanes (exp -> 0)


def _round_up(a, m):
    return (a + m - 1) // m * m


def _vmem_capacity_bytes():
    try:
        return int(pltpu.get_tpu_info().vmem_capacity_bytes)
    except Exception:
        return 64 * 1024 * 1024  # conservative (v7x per-TensorCore)


# ----------------------------------------------------------------------------
# One-time weight preparation (cache the result; do NOT call per forward).
# Params follow PyTorch layout: w1 (nh, nin), b1 (nh,), gamma/beta/mean/var
# (nh,), w2 (nclasses, nh), b2 (nclasses,).
# ----------------------------------------------------------------------------
def prepare_classifier_params(params, *, compute_dtype=jnp.bfloat16):
    nh, nin = params["w1"].shape
    nclasses = params["w2"].shape[0]

    # Fold BatchNorm1d (eval mode, running stats) into the first Linear.
    scale = params["gamma"] * jax.lax.rsqrt(params["var"] + EPS)       # (nh,)
    w1f = params["w1"].T * scale[None, :]                              # (nin, nh)
    b1f = (params["b1"] - params["mean"]) * scale + params["beta"]     # (nh,)
    w2t = params["w2"].T                                               # (nh, nc)

    # Padding: decouple nin padding from tk (pad to 512 for large nin).
    nin_align = 512 if nin >= 2048 else 128
    ninp = _round_up(nin, nin_align)
    nhp = _round_up(nh, 128)
    ncp = _round_up(nclasses, 128)

    prepared = {
        "w1": jnp.pad(w1f, ((0, ninp - nin), (0, nhp - nh))).astype(compute_dtype),
        "b1": jnp.pad(b1f, (0, nhp - nh)).reshape(1, nhp).astype(jnp.float32),
        "w2": jnp.pad(w2t, ((0, nhp - nh), (0, ncp - nclasses))).astype(compute_dtype),
        # b2 stays f32 so the -1e30 padded-lane bias survives.
        "b2": jnp.pad(params["b2"].astype(jnp.float32), (0, ncp - nclasses),
                      constant_values=NEG_INF).reshape(1, ncp),
    }
    meta = dict(nin=nin, nh=nh, nclasses=nclasses,
                ninp=ninp, nhp=nhp, ncp=ncp, compute_dtype=compute_dtype)
    return prepared, meta


# ----------------------------------------------------------------------------
# Kernels
# ----------------------------------------------------------------------------
def _resident_kernel(x_ref, w1_ref, b1_ref, w2_ref, b2_ref, out_ref):
    # Whole folded w1 is VMEM-resident (single-buffered, constant index map).
    x = x_ref[...].astype(w1_ref.dtype)
    h = jnp.dot(x, w1_ref[...], preferred_element_type=jnp.float32) + b1_ref[...]
    h = jnp.where(h >= 0.0, h, NEG_SLOPE * h)                      # LeakyReLU
    logits = jnp.dot(h.astype(w2_ref.dtype), w2_ref[...],
                     preferred_element_type=jnp.float32) + b2_ref[...]
    m = jnp.max(logits, axis=-1, keepdims=True)
    z = logits - m
    out_ref[...] = z - jnp.log(jnp.sum(jnp.exp(z), axis=-1, keepdims=True))


def _streamed_kernel(x_ref, w1_ref, b1_ref, w2_ref, b2_ref, out_ref, acc_ref):
    k = pl.program_id(1)

    @pl.when(k == 0)
    def _():
        acc_ref[...] = jnp.zeros_like(acc_ref)

    # Partial (tb, tk) @ (tk, nhp) on the MXU, f32 accumulation in VMEM.
    acc_ref[...] += jnp.dot(x_ref[...].astype(w1_ref.dtype), w1_ref[...],
                            preferred_element_type=jnp.float32)

    @pl.when(k == pl.num_programs(1) - 1)
    def _():
        h = acc_ref[...] + b1_ref[...]
        h = jnp.where(h >= 0.0, h, NEG_SLOPE * h)
        logits = jnp.dot(h.astype(w2_ref.dtype), w2_ref[...],
                         preferred_element_type=jnp.float32) + b2_ref[...]
        m = jnp.max(logits, axis=-1, keepdims=True)
        z = logits - m
        out_ref[...] = z - jnp.log(jnp.sum(jnp.exp(z), axis=-1, keepdims=True))


# ----------------------------------------------------------------------------
# Forward
# ----------------------------------------------------------------------------
def classifier_forward(x, prepared, meta, *, tb=256, tk_target=2048,
                       w1_resident=None, vmem_limit_bytes=None):
    B, nin = x.shape
    assert nin == meta["nin"], f"x has nin={nin}, params prepared for {meta['nin']}"
    ninp, nhp, ncp = meta["ninp"], meta["nhp"], meta["ncp"]
    nclasses = meta["nclasses"]
    cbytes = jnp.dtype(meta["compute_dtype"]).itemsize
    xbytes = jnp.dtype(x.dtype).itemsize

    # Batch tile: cap so batches >= 256 get >= 2 tiles (v7x megacore).
    Bp8 = _round_up(B, 8)
    tb = max(8, min(tb, Bp8))
    if Bp8 >= 256:
        tb = min(tb, _round_up((Bp8 + 1) // 2, 8))
    Bp = _round_up(B, tb)

    # VMEM budget.
    vmem_cap = _vmem_capacity_bytes()
    budget = (vmem_limit_bytes if vmem_limit_bytes is not None
              else min(int(0.7 * vmem_cap), 100 * 1024 * 1024))

    small = (nhp + ncp) * 4 * 2 + (1 << 20)      # biases + slack
    w2_b = nhp * ncp * cbytes                     # single-buffered

    def resident_bytes(tb_):
        return (ninp * nhp * cbytes               # w1, single-buffered
                + w2_b
                + 2 * tb_ * ninp * xbytes         # x, double-buffered
                + 2 * tb_ * ncp * 4               # out, double-buffered
                + small)

    if w1_resident is None:
        w1_resident = resident_bytes(tb) <= budget
        if not w1_resident and tb > 128 and resident_bytes(128) <= budget:
            tb = 128                              # shrink tb to make w1 fit (v7x)
            Bp = _round_up(B, tb)
            w1_resident = True

    # Pad x only if needed; no dtype cast here (kernel casts per tile).
    xp = x if (Bp == B and ninp == nin) else jnp.pad(x, ((0, Bp - B), (0, ninp - nin)))

    flops = 2 * Bp * ninp * nhp + 2 * Bp * nhp * ncp
    trans = Bp * ncp

    args = (xp, prepared["w1"], prepared["b1"], prepared["w2"], prepared["b2"])

    if w1_resident:
        rep = lambda i: (0, 0)
        cost = pl.CostEstimate(
            flops=flops, transcendentals=trans,
            bytes_accessed=Bp * ninp * xbytes + ninp * nhp * cbytes
                           + w2_b + Bp * ncp * 4)
        out = pl.pallas_call(
            _resident_kernel,
            out_shape=jax.ShapeDtypeStruct((Bp, ncp), jnp.float32),
            grid_spec=pltpu.PrefetchScalarGridSpec(
                num_scalar_prefetch=0,
                grid=(Bp // tb,),
                in_specs=[
                    pl.BlockSpec((tb, ninp), lambda i: (i, 0)),           # x
                    pl.BlockSpec((ninp, nhp), rep,
                                 pipeline_mode=pl.Buffered(1)),           # w1 resident
                    pl.BlockSpec((1, nhp), rep),                          # b1
                    pl.BlockSpec((nhp, ncp), rep,
                                 pipeline_mode=pl.Buffered(1)),           # w2
                    pl.BlockSpec((1, ncp), rep),                          # b2
                ],
                out_specs=pl.BlockSpec((tb, ncp), lambda i: (i, 0)),
            ),
            compiler_params=pltpu.CompilerParams(
                dimension_semantics=("parallel",),
                vmem_limit_bytes=budget,
            ),
            cost_estimate=cost,
        )(*args)
    else:
        # tk: largest divisor of ninp (multiple of 128, <= tk_target) that fits.
        def streamed_bytes(tk_):
            return (2 * tb * tk_ * xbytes + 2 * tk_ * nhp * cbytes
                    + tb * nhp * 4 + w2_b + 2 * tb * ncp * 4 + small)

        tk = 128
        for c in range(128, min(tk_target, ninp) + 1, 128):
            if ninp % c == 0 and streamed_bytes(c) <= budget:
                tk = c

        rep = lambda i, k: (0, 0)
        cost = pl.CostEstimate(
            flops=flops, transcendentals=trans,
            bytes_accessed=Bp * ninp * xbytes
                           + (Bp // tb) * ninp * nhp * cbytes
                           + w2_b + Bp * ncp * 4)
        out = pl.pallas_call(
            _streamed_kernel,
            out_shape=jax.ShapeDtypeStruct((Bp, ncp), jnp.float32),
            grid_spec=pltpu.PrefetchScalarGridSpec(
                num_scalar_prefetch=0,
                grid=(Bp // tb, ninp // tk),
                in_specs=[
                    pl.BlockSpec((tb, tk), lambda i, k: (i, k)),          # x tile
                    pl.BlockSpec((tk, nhp), lambda i, k: (k, 0)),         # w1 tile
                    pl.BlockSpec((1, nhp), rep),                          # b1
                    pl.BlockSpec((nhp, ncp), rep,
                                 pipeline_mode=pl.Buffered(1)),           # w2
                    pl.BlockSpec((1, ncp), rep),                          # b2
                ],
                out_specs=pl.BlockSpec((tb, ncp), lambda i, k: (i, 0)),
                scratch_shapes=[pltpu.VMEM((tb, nhp), jnp.float32)],
            ),
            compiler_params=pltpu.CompilerParams(
                dimension_semantics=("parallel", "arbitrary"),
                vmem_limit_bytes=budget,
            ),
            cost_estimate=cost,
        )(*args)

    return out[:B, :nclasses]


# ----------------------------------------------------------------------------
# References
# ----------------------------------------------------------------------------
def reference_forward(x, p):
    """Pure-f32 JAX mirror of the PyTorch eval-mode forward."""
    h = x @ p["w1"].T + p["b1"]
    h = (h - p["mean"]) / jnp.sqrt(p["var"] + EPS) * p["gamma"] + p["beta"]
    h = jnp.where(h >= 0.0, h, NEG_SLOPE * h)
    logits = h @ p["w2"].T + p["b2"]
    return jax.nn.log_softmax(logits, axis=1)


def quantized_reference(x, p, compute_dtype):
    """Same math with BN folded and matmul operands quantized to compute_dtype
    (matches what the kernel computes, up to accumulation order)."""
    scale = p["gamma"] * jax.lax.rsqrt(p["var"] + EPS)
    w1f = (p["w1"].T * scale[None, :]).astype(compute_dtype).astype(jnp.float32)
    b1f = (p["b1"] - p["mean"]) * scale + p["beta"]
    w2q = p["w2"].T.astype(compute_dtype).astype(jnp.float32)
    xq = x.astype(compute_dtype).astype(jnp.float32)
    h = xq @ w1f + b1f
    h = jnp.where(h >= 0.0, h, NEG_SLOPE * h)
    h = h.astype(compute_dtype).astype(jnp.float32)
    logits = h @ w2q + p["b2"]
    return jax.nn.log_softmax(logits, axis=1)


if __name__ == "__main__":
    # Small shapes consistent with the module (real module: nin=1e4, nh=1e3, nc=10).
    # B deliberately not a multiple of the batch tile to exercise padding.
    B, nin, nh, nclasses = 200, 1024, 256, 10

    key = jax.random.PRNGKey(0)
    ks = jax.random.split(key, 9)

    x = jax.random.normal(ks[0], (B, nin), jnp.float32)
    params = {
        "w1":    jax.random.normal(ks[1], (nh, nin), jnp.float32) / jnp.sqrt(nin),
        "b1":    0.01 * jax.random.normal(ks[2], (nh,), jnp.float32),
        "gamma": 1.0 + 0.1 * jax.random.normal(ks[3], (nh,), jnp.float32),
        "beta":  0.1 * jax.random.normal(ks[4], (nh,), jnp.float32),
        "mean":  0.1 * jax.random.normal(ks[5], (nh,), jnp.float32),
        "var":   jax.random.uniform(ks[6], (nh,), jnp.float32, minval=0.5, maxval=1.5),
        "w2":    jax.random.normal(ks[7], (nclasses, nh), jnp.float32) / jnp.sqrt(nh),
        "b2":    0.01 * jax.random.normal(ks[8], (nclasses,), jnp.float32),
    }

    # One-time weight prep (BN fold + pad + bf16 cast) — cache and reuse.
    prepared, meta = prepare_classifier_params(params)

    # Path 1: w1 VMEM-resident single-shot (auto-selected at these sizes).
    logp_res = jax.block_until_ready(classifier_forward(x, prepared, meta))

    # Path 2: K-tiled streaming (the fallback used when w1 exceeds the VMEM
    # budget at real sizes); forced here to exercise both kernels.
    logp_str = jax.block_until_ready(
        classifier_forward(x, prepared, meta, tb=64, tk_target=256,
                           w1_resident=False))

    q_ref = quantized_reference(x, params, jnp.bfloat16)
    f_ref = reference_forward(x, params)

    for name, logp in (("resident", logp_res), ("streamed", logp_str)):
        assert logp.shape == (B, nclasses), (name, logp.shape)
        # Rows of a log-softmax must exponentiate-sum to 1.
        assert jnp.allclose(jnp.sum(jnp.exp(logp), axis=1), 1.0, atol=1e-4), name
        # Tight check vs. a reference with identical bf16 operand quantization.
        assert jnp.allclose(logp, q_ref, atol=5e-3, rtol=0.0), \
            f"[{name}] max|diff| vs quantized ref = {jnp.max(jnp.abs(logp - q_ref))}"
        # Sanity vs. the pure-f32 PyTorch-style reference (bf16 noise allowed).
        assert jnp.allclose(logp, f_ref, atol=1e-1, rtol=0.0), \
            f"[{name}] max|diff| vs f32 ref = {jnp.max(jnp.abs(logp - f_ref))}"

    print("KERNEL_OK")
</pallas_src>

<mosaic_0001>
module attributes {stable_mosaic.version = 11 : i64} {
  func.func @_resident_kernel(%arg0: i32, %arg1: memref<200x1024xf32, #tpu.memory_space<vmem>>, %arg2: memref<1024x256xbf16, #tpu.memory_space<vmem>>, %arg3: memref<1x256xf32, #tpu.memory_space<vmem>>, %arg4: memref<256x128xbf16, #tpu.memory_space<vmem>>, %arg5: memref<1x128xf32, #tpu.memory_space<vmem>>, %arg6: memref<200x128xf32, #tpu.memory_space<vmem>>) attributes {dimension_semantics = [#tpu.dimension_semantics<parallel>], iteration_bounds = array<i64: 1>, scalar_prefetch = 0 : i64, scratch_operands = 0 : i64, tpu.core_type = #tpu.core_type<tc>, window_params = [{transform_indices = @transform_0, window_bounds = array<i64: 200, 1024>}, {pipeline_mode = #tpu.pipeline_mode<synchronous>, transform_indices = @transform_1, window_bounds = array<i64: 1024, 256>}, {pipeline_mode = #tpu.pipeline_mode<synchronous>, transform_indices = @transform_2, window_bounds = array<i64: 1, 256>}, {pipeline_mode = #tpu.pipeline_mode<synchronous>, transform_indices = @transform_3, window_bounds = array<i64: 256, 128>}, {pipeline_mode = #tpu.pipeline_mode<synchronous>, transform_indices = @transform_4, window_bounds = array<i64: 1, 128>}, {transform_indices = @transform_5, window_bounds = array<i64: 200, 128>}]} {
    %c0 = arith.constant 0 : index
    %c0_0 = arith.constant 0 : index
    %0 = vector.load %arg1[%c0, %c0_0] : memref<200x1024xf32, #tpu.memory_space<vmem>>, vector<200x1024xf32>
    %1 = arith.truncf %0 : vector<200x1024xf32> to vector<200x1024xbf16>
    %c0_1 = arith.constant 0 : index
    %c0_2 = arith.constant 0 : index
    %2 = vector.load %arg2[%c0_1, %c0_2] : memref<1024x256xbf16, #tpu.memory_space<vmem>>, vector<1024x256xbf16>
    %cst = arith.constant dense<0.000000e+00> : vector<200x256xf32>
    %3 = tpu.matmul %1, %2, %cst {dimension_numbers = #tpu.dot_dimension_numbers<[1], [0], [0], [1], [0, 0, 1, 1], [], []>} : vector<200x1024xbf16>, vector<1024x256xbf16>, vector<200x256xf32> -> vector<200x256xf32>
    %c0_3 = arith.constant 0 : index
    %c0_4 = arith.constant 0 : index
    %4 = vector.load %arg3[%c0_3, %c0_4] : memref<1x256xf32, #tpu.memory_space<vmem>>, vector<1x256xf32>
    %5 = vector.broadcast %4 : vector<1x256xf32> to vector<200x256xf32>
    %6 = arith.addf %3, %5 : vector<200x256xf32>
    %cst_5 = arith.constant 0.000000e+00 : f32
    %7 = vector.broadcast %cst_5 : f32 to vector<200x256xf32>
    %8 = arith.cmpf oge, %6, %7 : vector<200x256xf32>
    %cst_6 = arith.constant 0.00999999977 : f32
    %9 = vector.broadcast %cst_6 : f32 to vector<200x256xf32>
    %10 = arith.mulf %9, %6 : vector<200x256xf32>
    %11 = arith.select %8, %6, %10 : vector<200x256xi1>, vector<200x256xf32>
    %12 = arith.truncf %11 : vector<200x256xf32> to vector<200x256xbf16>
    %c0_7 = arith.constant 0 : index
    %c0_8 = arith.constant 0 : index
    %13 = vector.load %arg4[%c0_7, %c0_8] : memref<256x128xbf16, #tpu.memory_space<vmem>>, vector<256x128xbf16>
    %cst_9 = arith.constant dense<0.000000e+00> : vector<200x128xf32>
    %14 = tpu.matmul %12, %13, %cst_9 {dimension_numbers = #tpu.dot_dimension_numbers<[1], [0], [0], [1], [0, 0, 1, 1], [], []>} : vector<200x256xbf16>, vector<256x128xbf16>, vector<200x128xf32> -> vector<200x128xf32>
    %c0_10 = arith.constant 0 : index
    %c0_11 = arith.constant 0 : index
    %15 = vector.load %arg5[%c0_10, %c0_11] : memref<1x128xf32, #tpu.memory_space<vmem>>, vector<1x128xf32>
    %16 = vector.broadcast %15 : vector<1x128xf32> to vector<200x128xf32>
    %17 = arith.addf %14, %16 : vector<200x128xf32>
    %cst_12 = arith.constant dense<0xFF800000> : vector<200xf32>
    %18 = vector.multi_reduction <maximumf>, %17, %cst_12 [1] : vector<200x128xf32> to vector<200xf32>
    %19 = vector.shape_cast %18 : vector<200xf32> to vector<200x1xf32>
    %20 = vector.broadcast %19 : vector<200x1xf32> to vector<200x128xf32>
    %21 = arith.subf %17, %20 : vector<200x128xf32>
    %22 = math.exp %21 : vector<200x128xf32>
    %cst_13 = arith.constant dense<0.000000e+00> : vector<200xf32>
    %23 = vector.multi_reduction <add>, %22, %cst_13 [1] : vector<200x128xf32> to vector<200xf32>
    %24 = vector.shape_cast %23 : vector<200xf32> to vector<200x1xf32>
    %25 = math.log %24 : vector<200x1xf32>
    %26 = vector.broadcast %25 : vector<200x1xf32> to vector<200x128xf32>
    %27 = arith.subf %21, %26 : vector<200x128xf32>
    %c0_14 = arith.constant 0 : index
    %c0_15 = arith.constant 0 : index
    %28 = vector.load %arg6[%c0_14, %c0_15] : memref<200x128xf32, #tpu.memory_space<vmem>>, vector<200x128xf32>
    tpu.vector_store %arg6[%c0_14, %c0_15], %27 {strides = array<i32>} : memref<200x128xf32, #tpu.memory_space<vmem>>, vector<200x128xf32>,
    return
  }
  func.func @transform_0(%arg0: i32) -> (i32, i32) {
    %c0_i32 = arith.constant 0 : i32
    %c0_i32_0 = arith.constant 0 : i32
    return %arg0, %c0_i32 : i32, i32
  }
  func.func @transform_1(%arg0: i32) -> (i32, i32) {
    %c0_i32 = arith.constant 0 : i32
    %c0_i32_0 = arith.constant 0 : i32
    %c0_i32_1 = arith.constant 0 : i32
    return %c0_i32, %c0_i32_0 : i32, i32
  }
  func.func @transform_2(%arg0: i32) -> (i32, i32) {
    %c0_i32 = arith.constant 0 : i32
    %c0_i32_0 = arith.constant 0 : i32
    %c0_i32_1 = arith.constant 0 : i32
    return %c0_i32, %c0_i32_0 : i32, i32
  }
  func.func @transform_3(%arg0: i32) -> (i32, i32) {
    %c0_i32 = arith.constant 0 : i32
    %c0_i32_0 = arith.constant 0 : i32
    %c0_i32_1 = arith.constant 0 : i32
    return %c0_i32, %c0_i32_0 : i32, i32
  }
  func.func @transform_4(%arg0: i32) -> (i32, i32) {
    %c0_i32 = arith.constant 0 : i32
    %c0_i32_0 = arith.constant 0 : i32
    %c0_i32_1 = arith.constant 0 : i32
    return %c0_i32, %c0_i32_0 : i32, i32
  }
  func.func @transform_5(%arg0: i32) -> (i32, i32) {
    %c0_i32 = arith.constant 0 : i32
    %c0_i32_0 = arith.constant 0 : i32
    return %arg0, %c0_i32 : i32, i32
  }
}

</mosaic_0001>

<llo_original>
// kernel: tpu_custom_call.1
$region0: #{tpu_custom_call.1}
  #allocation0 [shape = 'u32[]', space=smem, size = 0x4, offset = 0x4, fixed_abs, tag = 'smem constant byte address 0x4 - core index']
  #allocation1 [shape = 'u32[72,128]{1,0:T(1,128)}', space=vmem, size = 0x9000, scoped, tag = 'internal scratch']
  %s0 = inlined_call_operand.hbm [shape: f32[200,1024], index: 0, kind: input, shape index: {}]
  %s1 = inlined_call_operand.hbm [shape: bf16[1024,256], index: 1, kind: input, shape index: {}]
  %s2 = inlined_call_operand.hbm [shape: f32[1,256], index: 2, kind: input, shape index: {}]
  %s3 = inlined_call_operand.hbm [shape: bf16[256,128], index: 3, kind: input, shape index: {}]
  %s4 = inlined_call_operand.vmem [shape: f32[1,128], index: 4, kind: input, shape index: {}]
  %s5 = inlined_call_operand.hbm [shape: f32[200,128], index: 5, kind: output, shape index: {}]
  %s6 = sld [smem:[#allocation0]]
  $region46: #{tpu_custom_call.1} parent=0
    _
  %s8 = ssub.s32 1, %s6
  %s9 = scalar_select 0, %s8, %s6
  $region1: #{tpu_custom_call.1} parent=0
    #allocation2 [shape = 'u8[819200]{0}', space=vmem, size = 0xc8000, scoped, tag = 'input window, operand 0, single buffered']
    #allocation3 [shape = 's32[1]{0}', space=sflag, size = 0x4, scoped, tag = 'scoped memory for tpu_custom_call.1']
    #allocation4 [shape = 's32[1]{0}', space=sflag, size = 0x4, scoped, tag = 'scoped memory for tpu_custom_call.1']
    #allocation5 [shape = 'u8[524288]{0}', space=vmem, size = 0x80000, scoped, tag = 'input window, operand 1, single buffered']
    #allocation6 [shape = 's32[1]{0}', space=sflag, size = 0x4, scoped, tag = 'scoped memory for tpu_custom_call.1']
    #allocation7 [shape = 'u8[1024]{0}', space=vmem, size = 0x400, scoped, tag = 'input window, operand 2, single buffered']
    #allocation8 [shape = 'u8[65536]{0}', space=vmem, size = 0x10000, scoped, tag = 'input window, operand 3, single buffered']
    #allocation9 [shape = 's32[1]{0}', space=sflag, size = 0x4, scoped, tag = 'scoped memory for tpu_custom_call.1']
    #allocation10 [shape = 'u8[102400]{0}', space=vmem, size = 0x19000, scoped, tag = 'output window, operand 0, single buffered']
    %10 = vsyncpa [#allocation3], 0
    %11 = vsyncpa [#allocation6], 0
    %12 = vsyncpa [#allocation9], 0
    %13 = vsyncpa [#allocation4], 0
    // Predicated region
    $region2: #{tpu_custom_call.1} parent=1 // pred_check
      _
    $region3: #{tpu_custom_call.1} parent=1 // pred_check_branch
      %15 = sbr.rel (0) target = $region5
    $region4: #{tpu_custom_call.1} parent=1 // pred_region
      %17 = vsyncadd [#allocation3], 0
      %s18 = sshll.u32 %s0, 4
      %s19 = int_to_ptr.hbm [resolvable:$true] %s18
      %s20 = sshll.u32 [#allocation2], 4
      %s21 = int_to_ptr.vmem [resolvable:$true] %s20
      %26 = dma.hbm_to_vmem [thread:$0]  %s19, 25600, %s21, [#allocation3], 1024, 1024, 64
    $region5: #{tpu_custom_call.1} parent=1 // pred_fallthru
      _
    // Predicated region
    $region6: #{tpu_custom_call.1} parent=1 // pred_check
      _
    $region7: #{tpu_custom_call.1} parent=1 // pred_check_branch
      %28 = sbr.rel (0) target = $region9
    $region8: #{tpu_custom_call.1} parent=1 // pred_region
      %30 = vsyncadd [#allocation6], 0
      %s31 = sshll.u32 %s1, 4
      %s32 = int_to_ptr.hbm [resolvable:$true] %s31
      %s33 = sshll.u32 [#allocation5], 4
      %s34 = int_to_ptr.vmem [resolvable:$true] %s33
      %39 = dma.hbm_to_vmem [thread:$0]  %s32, 16384, %s34, [#allocation6], 128, 128, 8
    $region9: #{tpu_custom_call.1} parent=1 // pred_fallthru
      _
    // Predicated region
    $region10: #{tpu_custom_call.1} parent=1 // pred_check
      _
    $region11: #{tpu_custom_call.1} parent=1 // pred_check_branch
      %41 = sbr.rel (0) target = $region13
    $region12: #{tpu_custom_call.1} parent=1 // pred_region
      %43 = vsyncadd [#allocation6], 0
      %s45 = sshll.u32 %s2, 4
      %s46 = int_to_ptr.hbm [resolvable:$true] %s45
      %s47 = sshll.u32 [#allocation7], 4
      %s48 = int_to_ptr.vmem [resolvable:$true] %s47
      %50 = dma.hbm_to_vmem [thread:$0]  %s46, 32, %s48, [#allocation6]
    $region13: #{tpu_custom_call.1} parent=1 // pred_fallthru
      _
    // Predicated region
    $region14: #{tpu_custom_call.1} parent=1 // pred_check
      _
    $region15: #{tpu_custom_call.1} parent=1 // pred_check_branch
      %52 = sbr.rel (0) target = $region17
    $region16: #{tpu_custom_call.1} parent=1 // pred_region
      %54 = vsyncadd [#allocation9], 0
      %s55 = sshll.u32 %s3, 4
      %s56 = int_to_ptr.hbm [resolvable:$true] %s55
      %s57 = sshll.u32 [#allocation8], 4
      %s58 = int_to_ptr.vmem [resolvable:$true] %s57
      %63 = dma.hbm_to_vmem [thread:$0]  %s56, 2048, %s58, [#allocation9], 64, 64, 4
    $region17: #{tpu_custom_call.1} parent=1 // pred_fallthru
      _
    // Predicated region
    $region18: #{tpu_custom_call.1} parent=1 // pred_check
      _
    $region19: #{tpu_custom_call.1} parent=1 // pred_check_branch
      %65 = sbr.rel (0) target = $region21
    $region20: #{tpu_custom_call.1} parent=1 // pred_region
      _
    $region21: #{tpu_custom_call.1} parent=1 // pred_fallthru
      _
    // Predicated region
    $region22: #{tpu_custom_call.1} parent=1 // pred_check
      _
    $region23: #{tpu_custom_call.1} parent=1 // pred_check_branch
      %67 = sbr.rel (0) target = $region25
    $region24: #{tpu_custom_call.1} parent=1 // pred_region
      %69 = dma.done [#allocation3], 25600
    $region25: #{tpu_custom_call.1} parent=1 // pred_fallthru
      _
    // Predicated region
    $region26: #{tpu_custom_call.1} parent=1 // pred_check
      _
    $region27: #{tpu_custom_call.1} parent=1 // pred_check_branch
      %71 = sbr.rel (0) target = $region29
    $region28: #{tpu_custom_call.1} parent=1 // pred_region
      %73 = dma.done [#allocation6], 16384
    $region29: #{tpu_custom_call.1} parent=1 // pred_fallthru
      _
    // Predicated region
    $region30: #{tpu_custom_call.1} parent=1 // pred_check
      _
    $region31: #{tpu_custom_call.1} parent=1 // pred_check_branch
      %75 = sbr.rel (0) target = $region33
    $region32: #{tpu_custom_call.1} parent=1 // pred_region
      %77 = dma.done [#allocation6], 32
    $region33: #{tpu_custom_call.1} parent=1 // pred_fallthru
      _
    // Predicated region
    $region34: #{tpu_custom_call.1} parent=1 // pred_check
      _
    $region35: #{tpu_custom_call.1} parent=1 // pred_check_branch
      %79 = sbr.rel (0) target = $region37
    $region36: #{tpu_custom_call.1} parent=1 // pred_region
      %81 = dma.done [#allocation9], 2048
    $region37: #{tpu_custom_call.1} parent=1 // pred_fallthru
      _
    %v82 = vld [vmem:[#allocation2] sm:$0xff]
    %v83 = vld [vmem:[#allocation2 + $0x8] sm:$0xff]
    %v84 = vld [vmem:[#allocation2 + $0x10] sm:$0xff]
    %v85 = vld [vmem:[#allocation2 + $0x18] sm:$0xff]
    %v86 = vld [vmem:[#allocation2 + $0x20] sm:$0xff]
    %v87 = vld [vmem:[#allocation2 + $0x28] sm:$0xff]
    %v88 = vld [vmem:[#allocation2 + $0x30] sm:$0xff]
    %v89 = vld [vmem:[#allocation2 + $0x38] sm:$0xff]
    %v90 = vld [vmem:[#allocation2 + $0x40] sm:$0xff]
    %v91 = vld [vmem:[#allocation2 + $0x48] sm:$0xff]
    %v92 = vld [vmem:[#allocation2 + $0x50] sm:$0xff]
    %v93 = vld [vmem:[#allocation2 + $0x58] sm:$0xff]
    %v94 = vld [vmem:[#allocation2 + $0x60] sm:$0xff]
    %v95 = vld [vmem:[#allocation2 + $0x68] sm:$0xff]
    %v96 = vld [vmem:[#allocation2 + $0x70] sm:$0xff]
    %v97 = vld [vmem:[#allocation2 + $0x78] sm:$0xff]
    %v98 = vld [vmem:[#allocation2 + $0x80] sm:$0xff]
    %v99 = vld [vmem:[#allocation2 + $0x88] sm:$0xff]
    %v100 = vld [vmem:[#allocation2 + $0x90] sm:$0xff]
    %v101 = vld [vmem:[#allocation2 + $0x98] sm:$0xff]
    %v102 = vld [vmem:[#allocation2 + $0xa0] sm:$0xff]
    %v103 = vld [vmem:[#allocation2 + $0xa8] sm:$0xff]
    %v104 = vld [vmem:[#allocation2 + $0xb0] sm:$0xff]
    %v105 = vld [vmem:[#allocation2 + $0xb8] sm:$0xff]
    %v106 = vld [vmem:[#allocation2 + $0xc0] sm:$0xff]
    %v107 = vld [vmem:[#allocation2 + $0xc8] sm:$0xff]
    %v108 = vld [vmem:[#allocation2 + $0xd0] sm:$0xff]
    %v109 = vld [vmem:[#allocation2 + $0xd8] sm:$0xff]
    %v110 = vld [vmem:[#allocation2 + $0xe0] sm:$0xff]
    %v111 = vld [vmem:[#allocation2 + $0xe8] sm:$0xff]
    %v112 = vld [vmem:[#allocation2 + $0xf0] sm:$0xff]
    %v113 = vld [vmem:[#allocation2 + $0xf8] sm:$0xff]
    %v114 = vld [vmem:[#allocation2 + $0x100] sm:$0xff]
    %v115 = vld [vmem:[#allocation2 + $0x108] sm:$0xff]
    %v116 = vld [vmem:[#allocation2 + $0x110] sm:$0xff]
    %v117 = vld [vmem:[#allocation2 + $0x118] sm:$0xff]
    %v118 = vld [vmem:[#allocation2 + $0x120] sm:$0xff]
    %v119 = vld [vmem:[#allocation2 + $0x128] sm:$0xff]
    %v120 = vld [vmem:[#allocation2 + $0x130] sm:$0xff]
    %v121 = vld [vmem:[#allocation2 + $0x138] sm:$0xff]
    %v122 = vld [vmem:[#allocation2 + $0x140] sm:$0xff]
    %v123 = vld [vmem:[#allocation2 + $0x148] sm:$0xff]
    %v124 = vld [vmem:[#allocation2 + $0x150] sm:$0xff]
    %v125 = vld [vmem:[#allocation2 + $0x158] sm:$0xff]
    %v126 = vld [vmem:[#allocation2 + $0x160] sm:$0xff]
    %v127 = vld [vmem:[#allocation2 + $0x168] sm:$0xff]
    %v128 = vld [vmem:[#allocation2 + $0x170] sm:$0xff]
    %v129 = vld [vmem:[#allocation2 + $0x178] sm:$0xff]
    %v130 = vld [vmem:[#allocation2 + $0x180] sm:$0xff]
    %v131 = vld [vmem:[#allocation2 + $0x188] sm:$0xff]
    %v132 = vld [vmem:[#allocation2 + $0x190] sm:$0xff]
    %v133 = vld [vmem:[#allocation2 + $0x198] sm:$0xff]
    %v134 = vld [vmem:[#allocation2 + $0x1a0] sm:$0xff]
    %v135 = vld [vmem:[#allocation2 + $0x1a8] sm:$0xff]
    %v136 = vld [vmem:[#allocation2 + $0x1b0] sm:$0xff]
    %v137 = vld [vmem:[#allocation2 + $0x1b8] sm:$0xff]
    %v138 = vld [vmem:[#allocation2 + $0x1c0] sm:$0xff]
    %v139 = vld [vmem:[#allocation2 + $0x1c8] sm:$0xff]
    %v140 = vld [vmem:[#allocation2 + $0x1d0] sm:$0xff]
    %v141 = vld [vmem:[#allocation2 + $0x1d8] sm:$0xff]
    %v142 = vld [vmem:[#allocation2 + $0x1e0] sm:$0xff]
    %v143 = vld [vmem:[#allocation2 + $0x1e8] sm:$0xff]
    %v144 = vld [vmem:[#allocation2 + $0x1f0] sm:$0xff]
    %v145 = vld [vmem:[#allocation2 + $0x1f8] sm:$0xff]
    %v146 = vld [vmem:[#allocation2 + $0x200] sm:$0xff]
    %v147 = vld [vmem:[#allocation2 + $0x208] sm:$0xff]
    %v148 = vld [vmem:[#allocation2 + $0x210] sm:$0xff]
    %v149 = vld [vmem:[#allocation2 + $0x218] sm:$0xff]
    %v150 = vld [vmem:[#allocation2 + $0x220] sm:$0xff]
    %v151 = vld [vmem:[#allocation2 + $0x228] sm:$0xff]
    %v152 = vld [vmem:[#allocation2 + $0x230] sm:$0xff]
    %v153 = vld [vmem:[#allocation2 + $0x238] sm:$0xff]
    %v154 = vld [vmem:[#allocation2 + $0x240] sm:$0xff]
    %v155 = vld [vmem:[#allocation2 + $0x248] sm:$0xff]
    %v156 = vld [vmem:[#allocation2 + $0x250] sm:$0xff]
    %v157 = vld [vmem:[#allocation2 + $0x258] sm:$0xff]
    %v158 = vld [vmem:[#allocation2 + $0x260] sm:$0xff]
    %v159 = vld [vmem:[#allocation2 + $0x268] sm:$0xff]
    %v160 = vld [vmem:[#allocation2 + $0x270] sm:$0xff]
    %v161 = vld [vmem:[#allocation2 + $0x278] sm:$0xff]
    %v162 = vld [vmem:[#allocation2 + $0x280] sm:$0xff]
    %v163 = vld [vmem:[#allocation2 + $0x288] sm:$0xff]
    %v164 = vld [vmem:[#allocation2 + $0x290] sm:$0xff]
    %v165 = vld [vmem:[#allocation2 + $0x298] sm:$0xff]
    %v166 = vld [vmem:[#allocation2 + $0x2a0] sm:$0xff]
    %v167 = vld [vmem:[#allocation2 + $0x2a8] sm:$0xff]
    %v168 = vld [vmem:[#allocation2 + $0x2b0] sm:$0xff]
    %v169 = vld [vmem:[#allocation2 + $0x2b8] sm:$0xff]
    %v170 = vld [vmem:[#allocation2 + $0x2c0] sm:$0xff]
    %v171 = vld [vmem:[#allocation2 + $0x2c8] sm:$0xff]
    %v172 = vld [vmem:[#allocation2 + $0x2d0] sm:$0xff]
    %v173 = vld [vmem:[#allocation2 + $0x2d8] sm:$0xff]
    %v174 = vld [vmem:[#allocation2 + $0x2e0] sm:$0xff]
    %v175 = vld [vmem:[#allocation2 + $0x2e8] sm:$0xff]
    %v176 = vld [vmem:[#allocation2 + $0x2f0] sm:$0xff]
    %v177 = vld [vmem:[#allocation2 + $0x2f8] sm:$0xff]
    %v178 = vld [vmem:[#allocation2 + $0x300] sm:$0xff]
    %v179 = vld [vmem:[#allocation2 + $0x308] sm:$0xff]
    %v180 = vld [vmem:[#allocation2 + $0x310] sm:$0xff]
    %v181 = vld [vmem:[#allocation2 + $0x318] sm:$0xff]
    %v182 = vld [vmem:[#allocation2 + $0x320] sm:$0xff]
    %v183 = vld [vmem:[#allocation2 + $0x328] sm:$0xff]
    %v184 = vld [vmem:[#allocation2 + $0x330] sm:$0xff]
    %v185 = vld [vmem:[#allocation2 + $0x338] sm:$0xff]
    %v186 = vld [vmem:[#allocation2 + $0x340] sm:$0xff]
    %v187 = vld [vmem:[#allocation2 + $0x348] sm:$0xff]
    %v188 = vld [vmem:[#allocation2 + $0x350] sm:$0xff]
    %v189 = vld [vmem:[#allocation2 + $0x358] sm:$0xff]
    %v190 = vld [vmem:[#allocation2 + $0x360] sm:$0xff]
    %v191 = vld [vmem:[#allocation2 + $0x368] sm:$0xff]
    %v192 = vld [vmem:[#allocation2 + $0x370] sm:$0xff]
    %v193 = vld [vmem:[#allocation2 + $0x378] sm:$0xff]
    %v194 = vld [vmem:[#allocation2 + $0x380] sm:$0xff]
    %v195 = vld [vmem:[#allocation2 + $0x388] sm:$0xff]
    %v196 = vld [vmem:[#allocation2 + $0x390] sm:$0xff]
    %v197 = vld [vmem:[#allocation2 + $0x398] sm:$0xff]
    %v198 = vld [vmem:[#allocation2 + $0x3a0] sm:$0xff]
    %v199 = vld [vmem:[#allocation2 + $0x3a8] sm:$0xff]
    %v200 = vld [vmem:[#allocation2 + $0x3b0] sm:$0xff]
    %v201 = vld [vmem:[#allocation2 + $0x3b8] sm:$0xff]
    %v202 = vld [vmem:[#allocation2 + $0x3c0] sm:$0xff]
    %v203 = vld [vmem:[#allocation2 + $0x3c8] sm:$0xff]
    %v204 = vld [vmem:[#allocation2 + $0x3d0] sm:$0xff]
    %v205 = vld [vmem:[#allocation2 + $0x3d8] sm:$0xff]
    %v206 = vld [vmem:[#allocation2 + $0x3e0] sm:$0xff]
    %v207 = vld [vmem:[#allocation2 + $0x3e8] sm:$0xff]
    %v208 = vld [vmem:[#allocation2 + $0x3f0] sm:$0xff]
    %v209 = vld [vmem:[#allocation2 + $0x3f8] sm:$0xff]
    %v210 = vld [vmem:[#allocation2 + $0x400] sm:$0xff]
    %v211 = vld [vmem:[#allocation2 + $0x408] sm:$0xff]
    %v212 = vld [vmem:[#allocation2 + $0x410] sm:$0xff]
    %v213 = vld [vmem:[#allocation2 + $0x418] sm:$0xff]
    %v214 = vld [vmem:[#allocation2 + $0x420] sm:$0xff]
    %v215 = vld [vmem:[#allocation2 + $0x428] sm:$0xff]
    %v216 = vld [vmem:[#allocation2 + $0x430] sm:$0xff]
    %v217 = vld [vmem:[#allocation2 + $0x438] sm:$0xff]
    %v218 = vld [vmem:[#allocation2 + $0x440] sm:$0xff]
    %v219 = vld [vmem:[#allocation2 + $0x448] sm:$0xff]
    %v220 = vld [vmem:[#allocation2 + $0x450] sm:$0xff]
    %v221 = vld [vmem:[#allocation2 + $0x458] sm:$0xff]
    %v222 = vld [vmem:[#allocation2 + $0x460] sm:$0xff]
    %v223 = vld [vmem:[#allocation2 + $0x468] sm:$0xff]
    %v224 = vld [vmem:[#allocation2 + $0x470] sm:$0xff]
    %v225 = vld [vmem:[#allocation2 + $0x478] sm:$0xff]
    %v226 = vld [vmem:[#allocation2 + $0x480] sm:$0xff]
    %v227 = vld [vmem:[#allocation2 + $0x488] sm:$0xff]
    %v228 = vld [vmem:[#allocation2 + $0x490] sm:$0xff]
    %v229 = vld [vmem:[#allocation2 + $0x498] sm:$0xff]
    %v230 = vld [vmem:[#allocation2 + $0x4a0] sm:$0xff]
    %v231 = vld [vmem:[#allocation2 + $0x4a8] sm:$0xff]
    %v232 = vld [vmem:[#allocation2 + $0x4b0] sm:$0xff]
    %v233 = vld [vmem:[#allocation2 + $0x4b8] sm:$0xff]
    %v234 = vld [vmem:[#allocation2 + $0x4c0] sm:$0xff]
    %v235 = vld [vmem:[#allocation2 + $0x4c8] sm:$0xff]
    %v236 = vld [vmem:[#allocation2 + $0x4d0] sm:$0xff]
    %v237 = vld [vmem:[#allocation2 + $0x4d8] sm:$0xff]
    %v238 = vld [vmem:[#allocation2 + $0x4e0] sm:$0xff]
    %v239 = vld [vmem:[#allocation2 + $0x4e8] sm:$0xff]
    %v240 = vld [vmem:[#allocation2 + $0x4f0] sm:$0xff]
    %v241 = vld [vmem:[#allocation2 + $0x4f8] sm:$0xff]
    %v242 = vld [vmem:[#allocation2 + $0x500] sm:$0xff]
    %v243 = vld [vmem:[#allocation2 + $0x508] sm:$0xff]
    %v244 = vld [vmem:[#allocation2 + $0x510] sm:$0xff]
    %v245 = vld [vmem:[#allocation2 + $0x518] sm:$0xff]
    %v246 = vld [vmem:[#allocation2 + $0x520] sm:$0xff]
    %v247 = vld [vmem:[#allocation2 + $0x528] sm:$0xff]
    %v248 = vld [vmem:[#allocation2 + $0x530] sm:$0xff]
    %v249 = vld [vmem:[#allocation2 + $0x538] sm:$0xff]
    %v250 = vld [vmem:[#allocation2 + $0x540] sm:$0xff]
    %v251 = vld [vmem:[#allocation2 + $0x548] sm:$0xff]
    %v252 = vld [vmem:[#allocation2 + $0x550] sm:$0xff]
    %v253 = vld [vmem:[#allocation2 + $0x558] sm:$0xff]
    %v254 = vld [vmem:[#allocation2 + $0x560] sm:$0xff]
    %v255 = vld [vmem:[#allocation2 + $0x568] sm:$0xff]
    %v256 = vld [vmem:[#allocation2 + $0x570] sm:$0xff]
    %v257 = vld [vmem:[#allocation2 + $0x578] sm:$0xff]
    %v258 = vld [vmem:[#allocation2 + $0x580] sm:$0xff]
    %v259 = vld [vmem:[#allocation2 + $0x588] sm:$0xff]
    %v260 = vld [vmem:[#allocation2 + $0x590] sm:$0xff]
    %v261 = vld [vmem:[#allocation2 + $0x598] sm:$0xff]
    %v262 = vld [vmem:[#allocation2 + $0x5a0] sm:$0xff]
    %v263 = vld [vmem:[#allocation2 + $0x5a8] sm:$0xff]
    %v264 = vld [vmem:[#allocation2 + $0x5b0] sm:$0xff]
    %v265 = vld [vmem:[#allocation2 + $0x5b8] sm:$0xff]
    %v266 = vld [vmem:[#allocation2 + $0x5c0] sm:$0xff]
    %v267 = vld [vmem:[#allocation2 + $0x5c8] sm:$0xff]
    %v268 = vld [vmem:[#allocation2 + $0x5d0] sm:$0xff]
    %v269 = vld [vmem:[#allocation2 + $0x5d8] sm:$0xff]
    %v270 = vld [vmem:[#allocation2 + $0x5e0] sm:$0xff]
    %v271 = vld [vmem:[#allocation2 + $0x5e8] sm:$0xff]
    %v272 = vld [vmem:[#allocation2 + $0x5f0] sm:$0xff]
    %v273 = vld [vmem:[#allocation2 + $0x5f8] sm:$0xff]
    %v274 = vld [vmem:[#allocation2 + $0x600] sm:$0xff]
    %v275 = vld [vmem:[#allocation2 + $0x608] sm:$0xff]
    %v276 = vld [vmem:[#allocation2 + $0x610] sm:$0xff]
    %v277 = vld [vmem:[#allocation2 + $0x618] sm:$0xff]
    %v278 = vld [vmem:[#allocation2 + $0x620] sm:$0xff]
    %v279 = vld [vmem:[#allocation2 + $0x628] sm:$0xff]
    %v280 = vld [vmem:[#allocation2 + $0x630] sm:$0xff]
    %v281 = vld [vmem:[#allocation2 + $0x638] sm:$0xff]
    %v282 = vpack.c.bf16 %v90, %v82
    %v283 = vpack.c.bf16 %v91, %v83
    %v284 = vpack.c.bf16 %v92, %v84
    %v285 = vpack.c.bf16 %v93, %v85
    %v286 = vpack.c.bf16 %v94, %v86
    %v287 = vpack.c.bf16 %v95, %v87
    %v288 = vpack.c.bf16 %v96, %v88
    %v289 = vpack.c.bf16 %v97, %v89
    %v290 = vpack.c.bf16 %v106, %v98
    %v291 = vpack.c.bf16 %v107, %v99
    %v292 = vpack.c.bf16 %v108, %v100
    %v293 = vpack.c.bf16 %v109, %v101
    %v294 = vpack.c.bf16 %v110, %v102
    %v295 = vpack.c.bf16 %v111, %v103
    %v296 = vpack.c.bf16 %v112, %v104
    %v297 = vpack.c.bf16 %v113, %v105
    %v298 = vpack.c.bf16 %v122, %v114
    %v299 = vpack.c.bf16 %v123, %v115
    %v300 = vpack.c.bf16 %v124, %v116
    %v301 = vpack.c.bf16 %v125, %v117
    %v302 = vpack.c.bf16 %v126, %v118
    %v303 = vpack.c.bf16 %v127, %v119
    %v304 = vpack.c.bf16 %v128, %v120
    %v305 = vpack.c.bf16 %v129, %v121
    %v306 = vpack.c.bf16 %v138, %v130
    %v307 = vpack.c.bf16 %v139, %v131
    %v308 = vpack.c.bf16 %v140, %v132
    %v309 = vpack.c.bf16 %v141, %v133
    %v310 = vpack.c.bf16 %v142, %v134
    %v311 = vpack.c.bf16 %v143, %v135
    %v312 = vpack.c.bf16 %v144, %v136
    %v313 = vpack.c.bf16 %v145, %v137
    %v314 = vpack.c.bf16 %v154, %v146
    %v315 = vpack.c.bf16 %v155, %v147
    %v316 = vpack.c.bf16 %v156, %v148
    %v317 = vpack.c.bf16 %v157, %v149
    %v318 = vpack.c.bf16 %v158, %v150
    %v319 = vpack.c.bf16 %v159, %v151
    %v320 = vpack.c.bf16 %v160, %v152
    %v321 = vpack.c.bf16 %v161, %v153
    %v322 = vpack.c.bf16 %v170, %v162
    %v323 = vpack.c.bf16 %v171, %v163
    %v324 = vpack.c.bf16 %v172, %v164
    %v325 = vpack.c.bf16 %v173, %v165
    %v326 = vpack.c.bf16 %v174, %v166
    %v327 = vpack.c.bf16 %v175, %v167
    %v328 = vpack.c.bf16 %v176, %v168
    %v329 = vpack.c.bf16 %v177, %v169
    %v330 = vpack.c.bf16 %v186, %v178
    %v331 = vpack.c.bf16 %v187, %v179
    %v332 = vpack.c.bf16 %v188, %v180
    %v333 = vpack.c.bf16 %v189, %v181
    %v334 = vpack.c.bf16 %v190, %v182
    %v335 = vpack.c.bf16 %v191, %v183
    %v336 = vpack.c.bf16 %v192, %v184
    %v337 = vpack.c.bf16 %v193, %v185
    %v338 = vpack.c.bf16 %v202, %v194
    %v339 = vpack.c.bf16 %v203, %v195
    %v340 = vpack.c.bf16 %v204, %v196
    %v341 = vpack.c.bf16 %v205, %v197
    %v342 = vpack.c.bf16 %v206, %v198
    %v343 = vpack.c.bf16 %v207, %v199
    %v344 = vpack.c.bf16 %v208, %v200
    %v345 = vpack.c.bf16 %v209, %v201
    %v346 = vpack.c.bf16 %v218, %v210
    %v347 = vpack.c.bf16 %v219, %v211
    %v348 = vpack.c.bf16 %v220, %v212
    %v349 = vpack.c.bf16 %v221, %v213
    %v350 = vpack.c.bf16 %v222, %v214
    %v351 = vpack.c.bf16 %v223, %v215
    %v352 = vpack.c.bf16 %v224, %v216
    %v353 = vpack.c.bf16 %v225, %v217
    %v354 = vpack.c.bf16 %v234, %v226
    %v355 = vpack.c.bf16 %v235, %v227
    %v356 = vpack.c.bf16 %v236, %v228
    %v357 = vpack.c.bf16 %v237, %v229
    %v358 = vpack.c.bf16 %v238, %v230
    %v359 = vpack.c.bf16 %v239, %v231
    %v360 = vpack.c.bf16 %v240, %v232
    %v361 = vpack.c.bf16 %v241, %v233
    %v362 = vpack.c.bf16 %v250, %v242
    %v363 = vpack.c.bf16 %v251, %v243
    %v364 = vpack.c.bf16 %v252, %v244
    %v365 = vpack.c.bf16 %v253, %v245
    %v366 = vpack.c.bf16 %v254, %v246
    %v367 = vpack.c.bf16 %v255, %v247
    %v368 = vpack.c.bf16 %v256, %v248
    %v369 = vpack.c.bf16 %v257, %v249
    %v370 = vpack.c.bf16 %v266, %v258
    %v371 = vpack.c.bf16 %v267, %v259
    %v372 = vpack.c.bf16 %v268, %v260
    %v373 = vpack.c.bf16 %v269, %v261
    %v374 = vpack.c.bf16 %v270, %v262
    %v375 = vpack.c.bf16 %v271, %v263
    %v376 = vpack.c.bf16 %v272, %v264
    %v377 = vpack.c.bf16 %v273, %v265
    %v378 = vpack.c.bf16 %v274, %v274
    %v379 = vpack.c.bf16 %v275, %v275
    %v380 = vpack.c.bf16 %v276, %v276
    %v381 = vpack.c.bf16 %v277, %v277
    %v382 = vpack.c.bf16 %v278, %v278
    %v383 = vpack.c.bf16 %v279, %v279
    %v384 = vpack.c.bf16 %v280, %v280
    %v385 = vpack.c.bf16 %v281, %v281
    %v386 = vld [vmem:[#allocation5] sm:$0xff]
    %v387 = vld [vmem:[#allocation5 + $0x8] sm:$0xff]
    %v388 = vld [vmem:[#allocation5 + $0x10] sm:$0xff]
    %v389 = vld [vmem:[#allocation5 + $0x18] sm:$0xff]
    %v390 = vld [vmem:[#allocation5 + $0x20] sm:$0xff]
    %v391 = vld [vmem:[#allocation5 + $0x28] sm:$0xff]
    %v392 = vld [vmem:[#allocation5 + $0x30] sm:$0xff]
    %v393 = vld [vmem:[#allocation5 + $0x38] sm:$0xff]
    %v394 = vld [vmem:[#allocation5 + $0x40] sm:$0xff]
    %v395 = vld [vmem:[#allocation5 + $0x48] sm:$0xff]
    %v396 = vld [vmem:[#allocation5 + $0x50] sm:$0xff]
    %v397 = vld [vmem:[#allocation5 + $0x58] sm:$0xff]
    %v398 = vld [vmem:[#allocation5 + $0x60] sm:$0xff]
    %v399 = vld [vmem:[#allocation5 + $0x68] sm:$0xff]
    %v400 = vld [vmem:[#allocation5 + $0x70] sm:$0xff]
    %v401 = vld [vmem:[#allocation5 + $0x78] sm:$0xff]
    %v402 = vld [vmem:[#allocation5 + $0x80] sm:$0xff]
    %v403 = vld [vmem:[#allocation5 + $0x88] sm:$0xff]
    %v404 = vld [vmem:[#allocation5 + $0x90] sm:$0xff]
    %v405 = vld [vmem:[#allocation5 + $0x98] sm:$0xff]
    %v406 = vld [vmem:[#allocation5 + $0xa0] sm:$0xff]
    %v407 = vld [vmem:[#allocation5 + $0xa8] sm:$0xff]
    %v408 = vld [vmem:[#allocation5 + $0xb0] sm:$0xff]
    %v409 = vld [vmem:[#allocation5 + $0xb8] sm:$0xff]
    %v410 = vld [vmem:[#allocation5 + $0xc0] sm:$0xff]
    %v411 = vld [vmem:[#allocation5 + $0xc8] sm:$0xff]
    %v412 = vld [vmem:[#allocation5 + $0xd0] sm:$0xff]
    %v413 = vld [vmem:[#allocation5 + $0xd8] sm:$0xff]
    %v414 = vld [vmem:[#allocation5 + $0xe0] sm:$0xff]
    %v415 = vld [vmem:[#allocation5 + $0xe8] sm:$0xff]
    %v416 = vld [vmem:[#allocation5 + $0xf0] sm:$0xff]
    %v417 = vld [vmem:[#allocation5 + $0xf8] sm:$0xff]
    %v418 = vld [vmem:[#allocation5 + $0x100] sm:$0xff]
    %v419 = vld [vmem:[#allocation5 + $0x108] sm:$0xff]
    %v420 = vld [vmem:[#allocation5 + $0x110] sm:$0xff]
    %v421 = vld [vmem:[#allocation5 + $0x118] sm:$0xff]
    %v422 = vld [vmem:[#allocation5 + $0x120] sm:$0xff]
    %v423 = vld [vmem:[#allocation5 + $0x128] sm:$0xff]
    %v424 = vld [vmem:[#allocation5 + $0x130] sm:$0xff]
    %v425 = vld [vmem:[#allocation5 + $0x138] sm:$0xff]
    %v426 = vld [vmem:[#allocation5 + $0x140] sm:$0xff]
    %v427 = vld [vmem:[#allocation5 + $0x148] sm:$0xff]
    %v428 = vld [vmem:[#allocation5 + $0x150] sm:$0xff]
    %v429 = vld [vmem:[#allocation5 + $0x158] sm:$0xff]
    %v430 = vld [vmem:[#allocation5 + $0x160] sm:$0xff]
    %v431 = vld [vmem:[#allocation5 + $0x168] sm:$0xff]
    %v432 = vld [vmem:[#allocation5 + $0x170] sm:$0xff]
    %v433 = vld [vmem:[#allocation5 + $0x178] sm:$0xff]
    %v434 = vld [vmem:[#allocation5 + $0x180] sm:$0xff]
    %v435 = vld [vmem:[#allocation5 + $0x188] sm:$0xff]
    %v436 = vld [vmem:[#allocation5 + $0x190] sm:$0xff]
    %v437 = vld [vmem:[#allocation5 + $0x198] sm:$0xff]
    %v438 = vld [vmem:[#allocation5 + $0x1a0] sm:$0xff]
    %v439 = vld [vmem:[#allocation5 + $0x1a8] sm:$0xff]
    %v440 = vld [vmem:[#allocation5 + $0x1b0] sm:$0xff]
    %v441 = vld [vmem:[#allocation5 + $0x1b8] sm:$0xff]
    %v442 = vld [vmem:[#allocation5 + $0x1c0] sm:$0xff]
    %v443 = vld [vmem:[#allocation5 + $0x1c8] sm:$0xff]
    %v444 = vld [vmem:[#allocation5 + $0x1d0] sm:$0xff]
    %v445 = vld [vmem:[#allocation5 + $0x1d8] sm:$0xff]
    %v446 = vld [vmem:[#allocation5 + $0x1e0] sm:$0xff]
    %v447 = vld [vmem:[#allocation5 + $0x1e8] sm:$0xff]
    %v448 = vld [vmem:[#allocation5 + $0x1f0] sm:$0xff]
    %v449 = vld [vmem:[#allocation5 + $0x1f8] sm:$0xff]
    %v450 = vld [vmem:[#allocation5 + $0x200] sm:$0xff]
    %v451 = vld [vmem:[#allocation5 + $0x208] sm:$0xff]
    %v452 = vld [vmem:[#allocation5 + $0x210] sm:$0xff]
    %v453 = vld [vmem:[#allocation5 + $0x218] sm:$0xff]
    %v454 = vld [vmem:[#allocation5 + $0x220] sm:$0xff]
    %v455 = vld [vmem:[#allocation5 + $0x228] sm:$0xff]
    %v456 = vld [vmem:[#allocation5 + $0x230] sm:$0xff]
    %v457 = vld [vmem:[#allocation5 + $0x238] sm:$0xff]
    %v458 = vld [vmem:[#allocation5 + $0x240] sm:$0xff]
    %v459 = vld [vmem:[#allocation5 + $0x248] sm:$0xff]
    %v460 = vld [vmem:[#allocation5 + $0x250] sm:$0xff]
    %v461 = vld [vmem:[#allocation5 + $0x258] sm:$0xff]
    %v462 = vld [vmem:[#allocation5 + $0x260] sm:$0xff]
    %v463 = vld [vmem:[#allocation5 + $0x268] sm:$0xff]
    %v464 = vld [vmem:[#allocation5 + $0x270] sm:$0xff]
    %v465 = vld [vmem:[#allocation5 + $0x278] sm:$0xff]
    %v466 = vld [vmem:[#allocation5 + $0x280] sm:$0xff]
    %v467 = vld [vmem:[#allocation5 + $0x288] sm:$0xff]
    %v468 = vld [vmem:[#allocation5 + $0x290] sm:$0xff]
    %v469 = vld [vmem:[#allocation5 + $0x298] sm:$0xff]
    %v470 = vld [vmem:[#allocation5 + $0x2a0] sm:$0xff]
    %v471 = vld [vmem:[#allocation5 + $0x2a8] sm:$0xff]
    %v472 = vld [vmem:[#allocation5 + $0x2b0] sm:$0xff]
    %v473 = vld [vmem:[#allocation5 + $0x2b8] sm:$0xff]
    %v474 = vld [vmem:[#allocation5 + $0x2c0] sm:$0xff]
    %v475 = vld [vmem:[#allocation5 + $0x2c8] sm:$0xff]
    %v476 = vld [vmem:[#allocation5 + $0x2d0] sm:$0xff]
    %v477 = vld [vmem:[#allocation5 + $0x2d8] sm:$0xff]
    %v478 = vld [vmem:[#allocation5 + $0x2e0] sm:$0xff]
    %v479 = vld [vmem:[#allocation5 + $0x2e8] sm:$0xff]
    %v480 = vld [vmem:[#allocation5 + $0x2f0] sm:$0xff]
    %v481 = vld [vmem:[#allocation5 + $0x2f8] sm:$0xff]
    %v482 = vld [vmem:[#allocation5 + $0x300] sm:$0xff]
    %v483 = vld [vmem:[#allocation5 + $0x308] sm:$0xff]
    %v484 = vld [vmem:[#allocation5 + $0x310] sm:$0xff]
    %v485 = vld [vmem:[#allocation5 + $0x318] sm:$0xff]
    %v486 = vld [vmem:[#allocation5 + $0x320] sm:$0xff]
    %v487 = vld [vmem:[#allocation5 + $0x328] sm:$0xff]
    %v488 = vld [vmem:[#allocation5 + $0x330] sm:$0xff]
    %v489 = vld [vmem:[#allocation5 + $0x338] sm:$0xff]
    %v490 = vld [vmem:[#allocation5 + $0x340] sm:$0xff]
    %v491 = vld [vmem:[#allocation5 + $0x348] sm:$0xff]
    %v492 = vld [vmem:[#allocation5 + $0x350] sm:$0xff]
    %v493 = vld [vmem:[#allocation5 + $0x358] sm:$0xff]
    %v494 = vld [vmem:[#allocation5 + $0x360] sm:$0xff]
    %v495 = vld [vmem:[#allocation5 + $0x368] sm:$0xff]
    %v496 = vld [vmem:[#allocation5 + $0x370] sm:$0xff]
    %v497 = vld [vmem:[#allocation5 + $0x378] sm:$0xff]
    %v498 = vld [vmem:[#allocation5 + $0x380] sm:$0xff]
    %v499 = vld [vmem:[#allocation5 + $0x388] sm:$0xff]
    %v500 = vld [vmem:[#allocation5 + $0x390] sm:$0xff]
    %v501 = vld [vmem:[#allocation5 + $0x398] sm:$0xff]
    %v502 = vld [vmem:[#allocation5 + $0x3a0] sm:$0xff]
    %v503 = vld [vmem:[#allocation5 + $0x3a8] sm:$0xff]
    %v504 = vld [vmem:[#allocation5 + $0x3b0] sm:$0xff]
    %v505 = vld [vmem:[#allocation5 + $0x3b8] sm:$0xff]
    %v506 = vld [vmem:[#allocation5 + $0x3c0] sm:$0xff]
    %v507 = vld [vmem:[#allocation5 + $0x3c8] sm:$0xff]
    %v508 = vld [vmem:[#allocation5 + $0x3d0] sm:$0xff]
    %v509 = vld [vmem:[#allocation5 + $0x3d8] sm:$0xff]
    %v510 = vld [vmem:[#allocation5 + $0x3e0] sm:$0xff]
    %v511 = vld [vmem:[#allocation5 + $0x3e8] sm:$0xff]
    %v512 = vld [vmem:[#allocation5 + $0x3f0] sm:$0xff]
    %v513 = vld [vmem:[#allocation5 + $0x3f8] sm:$0xff]
    %v514 = vld [vmem:[#allocation7] sm:$0x3]
    %v516 = vperm.slane %v514, 0
    %v517 = vperm.slane %v514, 1
    %v648 = vunpack.c.l.b16 %v386
    %v649 = vunpack.c.h.b16 %v386
    %v650 = vunpack.c.l.b16 %v387
    %v651 = vunpack.c.h.b16 %v387
    %v652 = vunpack.c.l.b16 %v388
    %v653 = vunpack.c.h.b16 %v388
    %v654 = vunpack.c.l.b16 %v389
    %v655 = vunpack.c.h.b16 %v389
    %v656 = vunpack.c.l.b16 %v390
    %v657 = vunpack.c.h.b16 %v390
    %v658 = vunpack.c.l.b16 %v391
    %v659 = vunpack.c.h.b16 %v391
    %v660 = vunpack.c.l.b16 %v392
    %v661 = vunpack.c.h.b16 %v392
    %v662 = vunpack.c.l.b16 %v393
    %v663 = vunpack.c.h.b16 %v393
    %v664 = vunpack.c.l.b16 %v394
    %v665 = vunpack.c.h.b16 %v394
    %v666 = vunpack.c.l.b16 %v395
    %v667 = vunpack.c.h.b16 %v395
    %v668 = vunpack.c.l.b16 %v396
    %v669 = vunpack.c.h.b16 %v396
    %v670 = vunpack.c.l.b16 %v397
    %v671 = vunpack.c.h.b16 %v397
    %v672 = vunpack.c.l.b16 %v398
    %v673 = vunpack.c.h.b16 %v398
    %v674 = vunpack.c.l.b16 %v399
    %v675 = vunpack.c.h.b16 %v399
    %v676 = vunpack.c.l.b16 %v400
    %v677 = vunpack.c.h.b16 %v400
    %v678 = vunpack.c.l.b16 %v401
    %v679 = vunpack.c.h.b16 %v401
    %v680 = vunpack.c.l.b16 %v402
    %v681 = vunpack.c.h.b16 %v402
    %v682 = vunpack.c.l.b16 %v403
    %v683 = vunpack.c.h.b16 %v403
    %v684 = vunpack.c.l.b16 %v404
    %v685 = vunpack.c.h.b16 %v404
    %v686 = vunpack.c.l.b16 %v405
    %v687 = vunpack.c.h.b16 %v405
    %v688 = vunpack.c.l.b16 %v406
    %v689 = vunpack.c.h.b16 %v406
    %v690 = vunpack.c.l.b16 %v407
    %v691 = vunpack.c.h.b16 %v407
    %v692 = vunpack.c.l.b16 %v408
    %v693 = vunpack.c.h.b16 %v408
    %v694 = vunpack.c.l.b16 %v409
    %v695 = vunpack.c.h.b16 %v409
    %v696 = vunpack.c.l.b16 %v410
    %v697 = vunpack.c.h.b16 %v410
    %v698 = vunpack.c.l.b16 %v411
    %v699 = vunpack.c.h.b16 %v411
    %v700 = vunpack.c.l.b16 %v412
    %v701 = vunpack.c.h.b16 %v412
    %v702 = vunpack.c.l.b16 %v413
    %v703 = vunpack.c.h.b16 %v413
    %v704 = vunpack.c.l.b16 %v414
    %v705 = vunpack.c.h.b16 %v414
    %v706 = vunpack.c.l.b16 %v415
    %v707 = vunpack.c.h.b16 %v415
    %v708 = vunpack.c.l.b16 %v416
    %v709 = vunpack.c.h.b16 %v416
    %v710 = vunpack.c.l.b16 %v417
    %v711 = vunpack.c.h.b16 %v417
    %v712 = vunpack.c.l.b16 %v418
    %v713 = vunpack.c.h.b16 %v418
    %v714 = vunpack.c.l.b16 %v419
    %v715 = vunpack.c.h.b16 %v419
    %v716 = vunpack.c.l.b16 %v420
    %v717 = vunpack.c.h.b16 %v420
    %v718 = vunpack.c.l.b16 %v421
    %v719 = vunpack.c.h.b16 %v421
    %v720 = vunpack.c.l.b16 %v422
    %v721 = vunpack.c.h.b16 %v422
    %v722 = vunpack.c.l.b16 %v423
    %v723 = vunpack.c.h.b16 %v423
    %v724 = vunpack.c.l.b16 %v424
    %v725 = vunpack.c.h.b16 %v424
    %v726 = vunpack.c.l.b16 %v425
    %v727 = vunpack.c.h.b16 %v425
    %v728 = vunpack.c.l.b16 %v426
    %v729 = vunpack.c.h.b16 %v426
    %v730 = vunpack.c.l.b16 %v427
    %v731 = vunpack.c.h.b16 %v427
    %v732 = vunpack.c.l.b16 %v428
    %v733 = vunpack.c.h.b16 %v428
    %v734 = vunpack.c.l.b16 %v429
    %v735 = vunpack.c.h.b16 %v429
    %v736 = vunpack.c.l.b16 %v430
    %v737 = vunpack.c.h.b16 %v430
    %v738 = vunpack.c.l.b16 %v431
    %v739 = vunpack.c.h.b16 %v431
    %v740 = vunpack.c.l.b16 %v432
    %v741 = vunpack.c.h.b16 %v432
    %v742 = vunpack.c.l.b16 %v433
    %v743 = vunpack.c.h.b16 %v433
    %v744 = vunpack.c.l.b16 %v434
    %v745 = vunpack.c.h.b16 %v434
    %v746 = vunpack.c.l.b16 %v435
    %v747 = vunpack.c.h.b16 %v435
    %v748 = vunpack.c.l.b16 %v436
    %v749 = vunpack.c.h.b16 %v436
    %v750 = vunpack.c.l.b16 %v437
    %v751 = vunpack.c.h.b16 %v437
    %v752 = vunpack.c.l.b16 %v438
    %v753 = vunpack.c.h.b16 %v438
    %v754 = vunpack.c.l.b16 %v439
    %v755 = vunpack.c.h.b16 %v439
    %v756 = vunpack.c.l.b16 %v440
    %v757 = vunpack.c.h.b16 %v440
    %v758 = vunpack.c.l.b16 %v441
    %v759 = vunpack.c.h.b16 %v441
    %v760 = vunpack.c.l.b16 %v442
    %v761 = vunpack.c.h.b16 %v442
    %v762 = vunpack.c.l.b16 %v443
    %v763 = vunpack.c.h.b16 %v443
    %v764 = vunpack.c.l.b16 %v444
    %v765 = vunpack.c.h.b16 %v444
    %v766 = vunpack.c.l.b16 %v445
    %v767 = vunpack.c.h.b16 %v445
    %v768 = vunpack.c.l.b16 %v446
    %v769 = vunpack.c.h.b16 %v446
    %v770 = vunpack.c.l.b16 %v447
    %v771 = vunpack.c.h.b16 %v447
    %v772 = vunpack.c.l.b16 %v448
    %v773 = vunpack.c.h.b16 %v448
    %v774 = vunpack.c.l.b16 %v449
    %v775 = vunpack.c.h.b16 %v449
    %v776 = vunpack.c.l.b16 %v450
    %v777 = vunpack.c.h.b16 %v450
    %v778 = vunpack.c.l.b16 %v451
    %v779 = vunpack.c.h.b16 %v451
    %v780 = vunpack.c.l.b16 %v452
    %v781 = vunpack.c.h.b16 %v452
    %v782 = vunpack.c.l.b16 %v453
    %v783 = vunpack.c.h.b16 %v453
    %v784 = vunpack.c.l.b16 %v454
    %v785 = vunpack.c.h.b16 %v454
    %v786 = vunpack.c.l.b16 %v455
    %v787 = vunpack.c.h.b16 %v455
    %v788 = vunpack.c.l.b16 %v456
    %v789 = vunpack.c.h.b16 %v456
    %v790 = vunpack.c.l.b16 %v457
    %v791 = vunpack.c.h.b16 %v457
    %v792 = vunpack.c.l.b16 %v458
    %v793 = vunpack.c.h.b16 %v458
    %v794 = vunpack.c.l.b16 %v459
    %v795 = vunpack.c.h.b16 %v459
    %v796 = vunpack.c.l.b16 %v460
    %v797 = vunpack.c.h.b16 %v460
    %v798 = vunpack.c.l.b16 %v461
    %v799 = vunpack.c.h.b16 %v461
    %v800 = vunpack.c.l.b16 %v462
    %v801 = vunpack.c.h.b16 %v462
    %v802 = vunpack.c.l.b16 %v463
    %v803 = vunpack.c.h.b16 %v463
    %v804 = vunpack.c.l.b16 %v464
    %v805 = vunpack.c.h.b16 %v464
    %v806 = vunpack.c.l.b16 %v465
    %v807 = vunpack.c.h.b16 %v465
    %v808 = vunpack.c.l.b16 %v466
    %v809 = vunpack.c.h.b16 %v466
    %v810 = vunpack.c.l.b16 %v467
    %v811 = vunpack.c.h.b16 %v467
    %v812 = vunpack.c.l.b16 %v468
    %v813 = vunpack.c.h.b16 %v468
    %v814 = vunpack.c.l.b16 %v469
    %v815 = vunpack.c.h.b16 %v469
    %v816 = vunpack.c.l.b16 %v470
    %v817 = vunpack.c.h.b16 %v470
    %v818 = vunpack.c.l.b16 %v471
    %v819 = vunpack.c.h.b16 %v471
    %v820 = vunpack.c.l.b16 %v472
    %v821 = vunpack.c.h.b16 %v472
    %v822 = vunpack.c.l.b16 %v473
    %v823 = vunpack.c.h.b16 %v473
    %v824 = vunpack.c.l.b16 %v474
    %v825 = vunpack.c.h.b16 %v474
    %v826 = vunpack.c.l.b16 %v475
    %v827 = vunpack.c.h.b16 %v475
    %v828 = vunpack.c.l.b16 %v476
    %v829 = vunpack.c.h.b16 %v476
    %v830 = vunpack.c.l.b16 %v477
    %v831 = vunpack.c.h.b16 %v477
    %v832 = vunpack.c.l.b16 %v478
    %v833 = vunpack.c.h.b16 %v478
    %v834 = vunpack.c.l.b16 %v479
    %v835 = vunpack.c.h.b16 %v479
    %v836 = vunpack.c.l.b16 %v480
    %v837 = vunpack.c.h.b16 %v480
    %v838 = vunpack.c.l.b16 %v481
    %v839 = vunpack.c.h.b16 %v481
    %v840 = vunpack.c.l.b16 %v482
    %v841 = vunpack.c.h.b16 %v482
    %v842 = vunpack.c.l.b16 %v483
    %v843 = vunpack.c.h.b16 %v483
    %v844 = vunpack.c.l.b16 %v484
    %v845 = vunpack.c.h.b16 %v484
    %v846 = vunpack.c.l.b16 %v485
    %v847 = vunpack.c.h.b16 %v485
    %v848 = vunpack.c.l.b16 %v486
    %v849 = vunpack.c.h.b16 %v486
    %v850 = vunpack.c.l.b16 %v487
    %v851 = vunpack.c.h.b16 %v487
    %v852 = vunpack.c.l.b16 %v488
    %v853 = vunpack.c.h.b16 %v488
    %v854 = vunpack.c.l.b16 %v489
    %v855 = vunpack.c.h.b16 %v489
    %v856 = vunpack.c.l.b16 %v490
    %v857 = vunpack.c.h.b16 %v490
    %v858 = vunpack.c.l.b16 %v491
    %v859 = vunpack.c.h.b16 %v491
    %v860 = vunpack.c.l.b16 %v492
    %v861 = vunpack.c.h.b16 %v492
    %v862 = vunpack.c.l.b16 %v493
    %v863 = vunpack.c.h.b16 %v493
    %v864 = vunpack.c.l.b16 %v494
    %v865 = vunpack.c.h.b16 %v494
    %v866 = vunpack.c.l.b16 %v495
    %v867 = vunpack.c.h.b16 %v495
    %v868 = vunpack.c.l.b16 %v496
    %v869 = vunpack.c.h.b16 %v496
    %v870 = vunpack.c.l.b16 %v497
    %v871 = vunpack.c.h.b16 %v497
    %v872 = vunpack.c.l.b16 %v498
    %v873 = vunpack.c.h.b16 %v498
    %v874 = vunpack.c.l.b16 %v499
    %v875 = vunpack.c.h.b16 %v499
    %v876 = vunpack.c.l.b16 %v500
    %v877 = vunpack.c.h.b16 %v500
    %v878 = vunpack.c.l.b16 %v501
    %v879 = vunpack.c.h.b16 %v501
    %v880 = vunpack.c.l.b16 %v502
    %v881 = vunpack.c.h.b16 %v502
    %v882 = vunpack.c.l.b16 %v503
    %v883 = vunpack.c.h.b16 %v503
    %v884 = vunpack.c.l.b16 %v504
    %v885 = vunpack.c.h.b16 %v504
    %v886 = vunpack.c.l.b16 %v505
    %v887 = vunpack.c.h.b16 %v505
    %v888 = vunpack.c.l.b16 %v506
    %v889 = vunpack.c.h.b16 %v506
    %v890 = vunpack.c.l.b16 %v507
    %v891 = vunpack.c.h.b16 %v507
    %v892 = vunpack.c.l.b16 %v508
    %v893 = vunpack.c.h.b16 %v508
    %v894 = vunpack.c.l.b16 %v509
    %v895 = vunpack.c.h.b16 %v509
    %v896 = vunpack.c.l.b16 %v510
    %v897 = vunpack.c.h.b16 %v510
    %v898 = vunpack.c.l.b16 %v511
    %v899 = vunpack.c.h.b16 %v511
    %v900 = vunpack.c.l.b16 %v512
    %v901 = vunpack.c.h.b16 %v512
    %v902 = vunpack.c.l.b16 %v513
    %v903 = vunpack.c.h.b16 %v513
    %v904 = vpack.c.b16 %v650, %v648
    %v905 = vpack.c.b16 %v651, %v649
    %v906 = vpack.c.b16 %v654, %v652
    %v907 = vpack.c.b16 %v655, %v653
    %v908 = vpack.c.b16 %v658, %v656
    %v909 = vpack.c.b16 %v659, %v657
    %v910 = vpack.c.b16 %v662, %v660
    %v911 = vpack.c.b16 %v663, %v661
    %v912 = vpack.c.b16 %v666, %v664
    %v913 = vpack.c.b16 %v667, %v665
    %v914 = vpack.c.b16 %v670, %v668
    %v915 = vpack.c.b16 %v671, %v669
    %v916 = vpack.c.b16 %v674, %v672
    %v917 = vpack.c.b16 %v675, %v673
    %v918 = vpack.c.b16 %v678, %v676
    %v919 = vpack.c.b16 %v679, %v677
    %v920 = vpack.c.b16 %v682, %v680
    %v921 = vpack.c.b16 %v683, %v681
    %v922 = vpack.c.b16 %v686, %v684
    %v923 = vpack.c.b16 %v687, %v685
    %v924 = vpack.c.b16 %v690, %v688
    %v925 = vpack.c.b16 %v691, %v689
    %v926 = vpack.c.b16 %v694, %v692
    %v927 = vpack.c.b16 %v695, %v693
    %v928 = vpack.c.b16 %v698, %v696
    %v929 = vpack.c.b16 %v699, %v697
    %v930 = vpack.c.b16 %v702, %v700
    %v931 = vpack.c.b16 %v703, %v701
    %v932 = vpack.c.b16 %v706, %v704
    %v933 = vpack.c.b16 %v707, %v705
    %v934 = vpack.c.b16 %v710, %v708
    %v935 = vpack.c.b16 %v711, %v709
    %v936 = vpack.c.b16 %v714, %v712
    %v937 = vpack.c.b16 %v715, %v713
    %v938 = vpack.c.b16 %v718, %v716
    %v939 = vpack.c.b16 %v719, %v717
    %v940 = vpack.c.b16 %v722, %v720
    %v941 = vpack.c.b16 %v723, %v721
    %v942 = vpack.c.b16 %v726, %v724
    %v943 = vpack.c.b16 %v727, %v725
    %v944 = vpack.c.b16 %v730, %v728
    %v945 = vpack.c.b16 %v731, %v729
    %v946 = vpack.c.b16 %v734, %v732
    %v947 = vpack.c.b16 %v735, %v733
    %v948 = vpack.c.b16 %v738, %v736
    %v949 = vpack.c.b16 %v739, %v737
    %v950 = vpack.c.b16 %v742, %v740
    %v951 = vpack.c.b16 %v743, %v741
    %v952 = vpack.c.b16 %v746, %v744
    %v953 = vpack.c.b16 %v747, %v745
    %v954 = vpack.c.b16 %v750, %v748
    %v955 = vpack.c.b16 %v751, %v749
    %v956 = vpack.c.b16 %v754, %v752
    %v957 = vpack.c.b16 %v755, %v753
    %v958 = vpack.c.b16 %v758, %v756
    %v959 = vpack.c.b16 %v759, %v757
    %v960 = vpack.c.b16 %v762, %v760
    %v961 = vpack.c.b16 %v763, %v761
    %v962 = vpack.c.b16 %v766, %v764
    %v963 = vpack.c.b16 %v767, %v765
    %v964 = vpack.c.b16 %v770, %v768
    %v965 = vpack.c.b16 %v771, %v769
    %v966 = vpack.c.b16 %v774, %v772
    %v967 = vpack.c.b16 %v775, %v773
    %v968 = vpack.c.b16 %v778, %v776
    %v969 = vpack.c.b16 %v779, %v777
    %v970 = vpack.c.b16 %v782, %v780
    %v971 = vpack.c.b16 %v783, %v781
    %v972 = vpack.c.b16 %v786, %v784
    %v973 = vpack.c.b16 %v787, %v785
    %v974 = vpack.c.b16 %v790, %v788
    %v975 = vpack.c.b16 %v791, %v789
    %v976 = vpack.c.b16 %v794, %v792
    %v977 = vpack.c.b16 %v795, %v793
    %v978 = vpack.c.b16 %v798, %v796
    %v979 = vpack.c.b16 %v799, %v797
    %v980 = vpack.c.b16 %v802, %v800
    %v981 = vpack.c.b16 %v803, %v801
    %v982 = vpack.c.b16 %v806, %v804
    %v983 = vpack.c.b16 %v807, %v805
    %v984 = vpack.c.b16 %v810, %v808
    %v985 = vpack.c.b16 %v811, %v809
    %v986 = vpack.c.b16 %v814, %v812
    %v987 = vpack.c.b16 %v815, %v813
    %v988 = vpack.c.b16 %v818, %v816
    %v989 = vpack.c.b16 %v819, %v817
    %v990 = vpack.c.b16 %v822, %v820
    %v991 = vpack.c.b16 %v823, %v821
    %v992 = vpack.c.b16 %v826, %v824
    %v993 = vpack.c.b16 %v827, %v825
    %v994 = vpack.c.b16 %v830, %v828
    %v995 = vpack.c.b16 %v831, %v829
    %v996 = vpack.c.b16 %v834, %v832
    %v997 = vpack.c.b16 %v835, %v833
    %v998 = vpack.c.b16 %v838, %v836
    %v999 = vpack.c.b16 %v839, %v837
    %v1000 = vpack.c.b16 %v842, %v840
    %v1001 = vpack.c.b16 %v843, %v841
    %v1002 = vpack.c.b16 %v846, %v844
    %v1003 = vpack.c.b16 %v847, %v845
    %v1004 = vpack.c.b16 %v850, %v848
    %v1005 = vpack.c.b16 %v851, %v849
    %v1006 = vpack.c.b16 %v854, %v852
    %v1007 = vpack.c.b16 %v855, %v853
    %v1008 = vpack.c.b16 %v858, %v856
    %v1009 = vpack.c.b16 %v859, %v857
    %v1010 = vpack.c.b16 %v862, %v860
    %v1011 = vpack.c.b16 %v863, %v861
    %v1012 = vpack.c.b16 %v866, %v864
    %v1013 = vpack.c.b16 %v867, %v865
    %v1014 = vpack.c.b16 %v870, %v868
    %v1015 = vpack.c.b16 %v871, %v869
    %v1016 = vpack.c.b16 %v874, %v872
    %v1017 = vpack.c.b16 %v875, %v873
    %v1018 = vpack.c.b16 %v878, %v876
    %v1019 = vpack.c.b16 %v879, %v877
    %v1020 = vpack.c.b16 %v882, %v880
    %v1021 = vpack.c.b16 %v883, %v881
    %v1022 = vpack.c.b16 %v886, %v884
    %v1023 = vpack.c.b16 %v887, %v885
    %v1024 = vpack.c.b16 %v890, %v888
    %v1025 = vpack.c.b16 %v891, %v889
    %v1026 = vpack.c.b16 %v894, %v892
    %v1027 = vpack.c.b16 %v895, %v893
    %v1028 = vpack.c.b16 %v898, %v896
    %v1029 = vpack.c.b16 %v899, %v897
    %v1030 = vpack.c.b16 %v902, %v900
    %v1031 = vpack.c.b16 %v903, %v901
    %1160 = vmatpush.bf16.msra.mxu0 %v918
    %1161 = vmatpush.bf16.msra.mxu0 %v916
    %1162 = vmatpush.bf16.msra.mxu0 %v914
    %1163 = vmatpush.bf16.msra.mxu0 %v912
    %1164 = vmatpush.bf16.msra.mxu0 %v910
    %1165 = vmatpush.bf16.msra.mxu0 %v908
    %1166 = vmatpush.bf16.msra.mxu0 %v906
    %1167 = vmatpush.bf16.msra.mxu0 %v904
    %1168 = vmatmul.bf16.gmra.mxu0 %v282
    %v1169 = vpop.f32.mrf.mxu0
    %v1170 = vadd.f32 %v516, %v1169
    %v1171 = vpop.f32.mrf.mxu0
    %v1172 = vadd.f32 %v516, %v1171
    %1173 = vmatmul.bf16.gmra.mxu0 %v290
    %v1174 = vpop.f32.mrf.mxu0
    %v1175 = vadd.f32 %v516, %v1174
    %v1176 = vpop.f32.mrf.mxu0
    %v1177 = vadd.f32 %v516, %v1176
    %1178 = vmatmul.bf16.gmra.mxu0 %v298
    %v1179 = vpop.f32.mrf.mxu0
    %v1180 = vadd.f32 %v516, %v1179
    %v1181 = vpop.f32.mrf.mxu0
    %v1182 = vadd.f32 %v516, %v1181
    %1183 = vmatmul.bf16.gmra.mxu0 %v306
    %v1184 = vpop.f32.mrf.mxu0
    %v1185 = vadd.f32 %v516, %v1184
    %v1186 = vpop.f32.mrf.mxu0
    %v1187 = vadd.f32 %v516, %v1186
    %1188 = vmatmul.bf16.gmra.mxu0 %v314
    %v1189 = vpop.f32.mrf.mxu0
    %v1190 = vadd.f32 %v516, %v1189
    %v1191 = vpop.f32.mrf.mxu0
    %v1192 = vadd.f32 %v516, %v1191
    %1193 = vmatmul.bf16.gmra.mxu0 %v322
    %v1194 = vpop.f32.mrf.mxu0
    %v1195 = vadd.f32 %v516, %v1194
    %v1196 = vpop.f32.mrf.mxu0
    %v1197 = vadd.f32 %v516, %v1196
    %1198 = vmatmul.bf16.gmra.mxu0 %v330
    %v1199 = vpop.f32.mrf.mxu0
    %v1200 = vadd.f32 %v516, %v1199
    %v1201 = vpop.f32.mrf.mxu0
    %v1202 = vadd.f32 %v516, %v1201
    %1203 = vmatmul.bf16.gmra.mxu0 %v338
    %v1204 = vpop.f32.mrf.mxu0
    %v1205 = vadd.f32 %v516, %v1204
    %v1206 = vpop.f32.mrf.mxu0
    %v1207 = vadd.f32 %v516, %v1206
    %1208 = vmatmul.bf16.gmra.mxu0 %v346
    %v1209 = vpop.f32.mrf.mxu0
    %v1210 = vadd.f32 %v516, %v1209
    %v1211 = vpop.f32.mrf.mxu0
    %v1212 = vadd.f32 %v516, %v1211
    %1213 = vmatmul.bf16.gmra.mxu0 %v354
    %v1214 = vpop.f32.mrf.mxu0
    %v1215 = vadd.f32 %v516, %v1214
    %v1216 = vpop.f32.mrf.mxu0
    %v1217 = vadd.f32 %v516, %v1216
    %1218 = vmatmul.bf16.gmra.mxu0 %v362
    %v1219 = vpop.f32.mrf.mxu0
    %v1220 = vadd.f32 %v516, %v1219
    %v1221 = vpop.f32.mrf.mxu0
    %v1222 = vadd.f32 %v516, %v1221
    %1223 = vmatmul.bf16.gmra.mxu0 %v370
    %v1224 = vpop.f32.mrf.mxu0
    %v1225 = vadd.f32 %v516, %v1224
    %v1226 = vpop.f32.mrf.mxu0
    %v1227 = vadd.f32 %v516, %v1226
    %1228 = vmatmul.bf16.gmra.mxu0 %v378
    %v1229 = vpop.f32.mrf.mxu0
    %v1230 = vadd.f32 %v516, %v1229
    %v1231 = vpop.f32.mrf.mxu0
    %1232 = vdwg.mxu0
    %1233 = vmatpush.bf16.msra.mxu0 %v934
    %1234 = vmatpush.bf16.msra.mxu0 %v932
    %1235 = vmatpush.bf16.msra.mxu0 %v930
    %1236 = vmatpush.bf16.msra.mxu0 %v928
    %1237 = vmatpush.bf16.msra.mxu0 %v926
    %1238 = vmatpush.bf16.msra.mxu0 %v924
    %1239 = vmatpush.bf16.msra.mxu0 %v922
    %1240 = vmatpush.bf16.msra.mxu0 %v920
    %1241 = vmatmul.bf16.gmra.mxu0 %v283
    %v1242 = vpop.f32.mrf.mxu0
    %v1243 = vadd.f32 %v1170, %v1242
    %v1244 = vpop.f32.mrf.mxu0
    %v1245 = vadd.f32 %v1172, %v1244
    %1246 = vmatmul.bf16.gmra.mxu0 %v291
    %v1247 = vpop.f32.mrf.mxu0
    %v1248 = vadd.f32 %v1175, %v1247
    %v1249 = vpop.f32.mrf.mxu0
    %v1250 = vadd.f32 %v1177, %v1249
    %1251 = vmatmul.bf16.gmra.mxu0 %v299
    %v1252 = vpop.f32.mrf.mxu0
    %v1253 = vadd.f32 %v1180, %v1252
    %v1254 = vpop.f32.mrf.mxu0
    %v1255 = vadd.f32 %v1182, %v1254
    %1256 = vmatmul.bf16.gmra.mxu0 %v307
    %v1257 = vpop.f32.mrf.mxu0
    %v1258 = vadd.f32 %v1185, %v1257
    %v1259 = vpop.f32.mrf.mxu0
    %v1260 = vadd.f32 %v1187, %v1259
    %1261 = vmatmul.bf16.gmra.mxu0 %v315
    %v1262 = vpop.f32.mrf.mxu0
    %v1263 = vadd.f32 %v1190, %v1262
    %v1264 = vpop.f32.mrf.mxu0
    %v1265 = vadd.f32 %v1192, %v1264
    %1266 = vmatmul.bf16.gmra.mxu0 %v323
    %v1267 = vpop.f32.mrf.mxu0
    %v1268 = vadd.f32 %v1195, %v1267
    %v1269 = vpop.f32.mrf.mxu0
    %v1270 = vadd.f32 %v1197, %v1269
    %1271 = vmatmul.bf16.gmra.mxu0 %v331
    %v1272 = vpop.f32.mrf.mxu0
    %v1273 = vadd.f32 %v1200, %v1272
    %v1274 = vpop.f32.mrf.mxu0
    %v1275 = vadd.f32 %v1202, %v1274
    %1276 = vmatmul.bf16.gmra.mxu0 %v339
    %v1277 = vpop.f32.mrf.mxu0
    %v1278 = vadd.f32 %v1205, %v1277
    %v1279 = vpop.f32.mrf.mxu0
    %v1280 = vadd.f32 %v1207, %v1279
    %1281 = vmatmul.bf16.gmra.mxu0 %v347
    %v1282 = vpop.f32.mrf.mxu0
    %v1283 = vadd.f32 %v1210, %v1282
    %v1284 = vpop.f32.mrf.mxu0
    %v1285 = vadd.f32 %v1212, %v1284
    %1286 = vmatmul.bf16.gmra.mxu0 %v355
    %v1287 = vpop.f32.mrf.mxu0
    %v1288 = vadd.f32 %v1215, %v1287
    %v1289 = vpop.f32.mrf.mxu0
    %v1290 = vadd.f32 %v1217, %v1289
    %1291 = vmatmul.bf16.gmra.mxu0 %v363
    %v1292 = vpop.f32.mrf.mxu0
    %v1293 = vadd.f32 %v1220, %v1292
    %v1294 = vpop.f32.mrf.mxu0
    %v1295 = vadd.f32 %v1222, %v1294
    %1296 = vmatmul.bf16.gmra.mxu0 %v371
    %v1297 = vpop.f32.mrf.mxu0
    %v1298 = vadd.f32 %v1225, %v1297
    %v1299 = vpop.f32.mrf.mxu0
    %v1300 = vadd.f32 %v1227, %v1299
    %1301 = vmatmul.bf16.gmra.mxu0 %v379
    %v1302 = vpop.f32.mrf.mxu0
    %v1303 = vadd.f32 %v1230, %v1302
    %v1304 = vpop.f32.mrf.mxu0
    %1305 = vdwg.mxu0
    %1306 = vmatpush.bf16.msra.mxu0 %v950
    %1307 = vmatpush.bf16.msra.mxu0 %v948
    %1308 = vmatpush.bf16.msra.mxu0 %v946
    %1309 = vmatpush.bf16.msra.mxu0 %v944
    %1310 = vmatpush.bf16.msra.mxu0 %v942
    %1311 = vmatpush.bf16.msra.mxu0 %v940
    %1312 = vmatpush.bf16.msra.mxu0 %v938
    %1313 = vmatpush.bf16.msra.mxu0 %v936
    %1314 = vmatmul.bf16.gmra.mxu0 %v284
    %v1315 = vpop.f32.mrf.mxu0
    %v1316 = vadd.f32 %v1243, %v1315
    %v1317 = vpop.f32.mrf.mxu0
    %v1318 = vadd.f32 %v1245, %v1317
    %1319 = vmatmul.bf16.gmra.mxu0 %v292
    %v1320 = vpop.f32.mrf.mxu0
    %v1321 = vadd.f32 %v1248, %v1320
    %v1322 = vpop.f32.mrf.mxu0
    %v1323 = vadd.f32 %v1250, %v1322
    %1324 = vmatmul.bf16.gmra.mxu0 %v300
    %v1325 = vpop.f32.mrf.mxu0
    %v1326 = vadd.f32 %v1253, %v1325
    %v1327 = vpop.f32.mrf.mxu0
    %v1328 = vadd.f32 %v1255, %v1327
    %1329 = vmatmul.bf16.gmra.mxu0 %v308
    %v1330 = vpop.f32.mrf.mxu0
    %v1331 = vadd.f32 %v1258, %v1330
    %v1332 = vpop.f32.mrf.mxu0
    %v1333 = vadd.f32 %v1260, %v1332
    %1334 = vmatmul.bf16.gmra.mxu0 %v316
    %v1335 = vpop.f32.mrf.mxu0
    %v1336 = vadd.f32 %v1263, %v1335
    %v1337 = vpop.f32.mrf.mxu0
    %v1338 = vadd.f32 %v1265, %v1337
    %1339 = vmatmul.bf16.gmra.mxu0 %v324
    %v1340 = vpop.f32.mrf.mxu0
    %v1341 = vadd.f32 %v1268, %v1340
    %v1342 = vpop.f32.mrf.mxu0
    %v1343 = vadd.f32 %v1270, %v1342
    %1344 = vmatmul.bf16.gmra.mxu0 %v332
    %v1345 = vpop.f32.mrf.mxu0
    %v1346 = vadd.f32 %v1273, %v1345
    %v1347 = vpop.f32.mrf.mxu0
    %v1348 = vadd.f32 %v1275, %v1347
    %1349 = vmatmul.bf16.gmra.mxu0 %v340
    %v1350 = vpop.f32.mrf.mxu0
    %v1351 = vadd.f32 %v1278, %v1350
    %v1352 = vpop.f32.mrf.mxu0
    %v1353 = vadd.f32 %v1280, %v1352
    %1354 = vmatmul.bf16.gmra.mxu0 %v348
    %v1355 = vpop.f32.mrf.mxu0
    %v1356 = vadd.f32 %v1283, %v1355
    %v1357 = vpop.f32.mrf.mxu0
    %v1358 = vadd.f32 %v1285, %v1357
    %1359 = vmatmul.bf16.gmra.mxu0 %v356
    %v1360 = vpop.f32.mrf.mxu0
    %v1361 = vadd.f32 %v1288, %v1360
    %v1362 = vpop.f32.mrf.mxu0
    %v1363 = vadd.f32 %v1290, %v1362
    %1364 = vmatmul.bf16.gmra.mxu0 %v364
    %v1365 = vpop.f32.mrf.mxu0
    %v1366 = vadd.f32 %v1293, %v1365
    %v1367 = vpop.f32.mrf.mxu0
    %v1368 = vadd.f32 %v1295, %v1367
    %1369 = vmatmul.bf16.gmra.mxu0 %v372
    %v1370 = vpop.f32.mrf.mxu0
    %v1371 = vadd.f32 %v1298, %v1370
    %v1372 = vpop.f32.mrf.mxu0
    %v1373 = vadd.f32 %v1300, %v1372
    %1374 = vmatmul.bf16.gmra.mxu0 %v380
    %v1375 = vpop.f32.mrf.mxu0
    %v1376 = vadd.f32 %v1303, %v1375
    %v1377 = vpop.f32.mrf.mxu0
    %1378 = vdwg.mxu0
    %1379 = vmatpush.bf16.msra.mxu0 %v966
    %1380 = vmatpush.bf16.msra.mxu0 %v964
    %1381 = vmatpush.bf16.msra.mxu0 %v962
    %1382 = vmatpush.bf16.msra.mxu0 %v960
    %1383 = vmatpush.bf16.msra.mxu0 %v958
    %1384 = vmatpush.bf16.msra.mxu0 %v956
    %1385 = vmatpush.bf16.msra.mxu0 %v954
    %1386 = vmatpush.bf16.msra.mxu0 %v952
    %1387 = vmatmul.bf16.gmra.mxu0 %v285
    %v1388 = vpop.f32.mrf.mxu0
    %v1389 = vadd.f32 %v1316, %v1388
    %v1390 = vpop.f32.mrf.mxu0
    %v1391 = vadd.f32 %v1318, %v1390
    %1392 = vmatmul.bf16.gmra.mxu0 %v293
    %v1393 = vpop.f32.mrf.mxu0
    %v1394 = vadd.f32 %v1321, %v1393
    %v1395 = vpop.f32.mrf.mxu0
    %v1396 = vadd.f32 %v1323, %v1395
    %1397 = vmatmul.bf16.gmra.mxu0 %v301
    %v1398 = vpop.f32.mrf.mxu0
    %v1399 = vadd.f32 %v1326, %v1398
    %v1400 = vpop.f32.mrf.mxu0
    %v1401 = vadd.f32 %v1328, %v1400
    %1402 = vmatmul.bf16.gmra.mxu0 %v309
    %v1403 = vpop.f32.mrf.mxu0
    %v1404 = vadd.f32 %v1331, %v1403
    %v1405 = vpop.f32.mrf.mxu0
    %v1406 = vadd.f32 %v1333, %v1405
    %1407 = vmatmul.bf16.gmra.mxu0 %v317
    %v1408 = vpop.f32.mrf.mxu0
    %v1409 = vadd.f32 %v1336, %v1408
    %v1410 = vpop.f32.mrf.mxu0
    %v1411 = vadd.f32 %v1338, %v1410
    %1412 = vmatmul.bf16.gmra.mxu0 %v325
    %v1413 = vpop.f32.mrf.mxu0
    %v1414 = vadd.f32 %v1341, %v1413
    %v1415 = vpop.f32.mrf.mxu0
    %v1416 = vadd.f32 %v1343, %v1415
    %1417 = vmatmul.bf16.gmra.mxu0 %v333
    %v1418 = vpop.f32.mrf.mxu0
    %v1419 = vadd.f32 %v1346, %v1418
    %v1420 = vpop.f32.mrf.mxu0
    %v1421 = vadd.f32 %v1348, %v1420
    %1422 = vmatmul.bf16.gmra.mxu0 %v341
    %v1423 = vpop.f32.mrf.mxu0
    %v1424 = vadd.f32 %v1351, %v1423
    %v1425 = vpop.f32.mrf.mxu0
    %v1426 = vadd.f32 %v1353, %v1425
    %1427 = vmatmul.bf16.gmra.mxu0 %v349
    %v1428 = vpop.f32.mrf.mxu0
    %v1429 = vadd.f32 %v1356, %v1428
    %v1430 = vpop.f32.mrf.mxu0
    %v1431 = vadd.f32 %v1358, %v1430
    %1432 = vmatmul.bf16.gmra.mxu0 %v357
    %v1433 = vpop.f32.mrf.mxu0
    %v1434 = vadd.f32 %v1361, %v1433
    %v1435 = vpop.f32.mrf.mxu0
    %v1436 = vadd.f32 %v1363, %v1435
    %1437 = vmatmul.bf16.gmra.mxu0 %v365
    %v1438 = vpop.f32.mrf.mxu0
    %v1439 = vadd.f32 %v1366, %v1438
    %v1440 = vpop.f32.mrf.mxu0
    %v1441 = vadd.f32 %v1368, %v1440
    %1442 = vmatmul.bf16.gmra.mxu0 %v373
    %v1443 = vpop.f32.mrf.mxu0
    %v1444 = vadd.f32 %v1371, %v1443
    %v1445 = vpop.f32.mrf.mxu0
    %v1446 = vadd.f32 %v1373, %v1445
    %1447 = vmatmul.bf16.gmra.mxu0 %v381
    %v1448 = vpop.f32.mrf.mxu0
    %v1449 = vadd.f32 %v1376, %v1448
    %v1450 = vpop.f32.mrf.mxu0
    %1451 = vdwg.mxu0
    %1452 = vmatpush.bf16.msra.mxu0 %v982
    %1453 = vmatpush.bf16.msra.mxu0 %v980
    %1454 = vmatpush.bf16.msra.mxu0 %v978
    %1455 = vmatpush.bf16.msra.mxu0 %v976
    %1456 = vmatpush.bf16.msra.mxu0 %v974
    %1457 = vmatpush.bf16.msra.mxu0 %v972
    %1458 = vmatpush.bf16.msra.mxu0 %v970
    %1459 = vmatpush.bf16.msra.mxu0 %v968
    %1460 = vmatmul.bf16.gmra.mxu0 %v286
    %v1461 = vpop.f32.mrf.mxu0
    %v1462 = vadd.f32 %v1389, %v1461
    %v1463 = vpop.f32.mrf.mxu0
    %v1464 = vadd.f32 %v1391, %v1463
    %1465 = vmatmul.bf16.gmra.mxu0 %v294
    %v1466 = vpop.f32.mrf.mxu0
    %v1467 = vadd.f32 %v1394, %v1466
    %v1468 = vpop.f32.mrf.mxu0
    %v1469 = vadd.f32 %v1396, %v1468
    %1470 = vmatmul.bf16.gmra.mxu0 %v302
    %v1471 = vpop.f32.mrf.mxu0
    %v1472 = vadd.f32 %v1399, %v1471
    %v1473 = vpop.f32.mrf.mxu0
    %v1474 = vadd.f32 %v1401, %v1473
    %1475 = vmatmul.bf16.gmra.mxu0 %v310
    %v1476 = vpop.f32.mrf.mxu0
    %v1477 = vadd.f32 %v1404, %v1476
    %v1478 = vpop.f32.mrf.mxu0
    %v1479 = vadd.f32 %v1406, %v1478
    %1480 = vmatmul.bf16.gmra.mxu0 %v318
    %v1481 = vpop.f32.mrf.mxu0
    %v1482 = vadd.f32 %v1409, %v1481
    %v1483 = vpop.f32.mrf.mxu0
    %v1484 = vadd.f32 %v1411, %v1483
    %1485 = vmatmul.bf16.gmra.mxu0 %v326
    %v1486 = vpop.f32.mrf.mxu0
    %v1487 = vadd.f32 %v1414, %v1486
    %v1488 = vpop.f32.mrf.mxu0
    %v1489 = vadd.f32 %v1416, %v1488
    %1490 = vmatmul.bf16.gmra.mxu0 %v334
    %v1491 = vpop.f32.mrf.mxu0
    %v1492 = vadd.f32 %v1419, %v1491
    %v1493 = vpop.f32.mrf.mxu0
    %v1494 = vadd.f32 %v1421, %v1493
    %1495 = vmatmul.bf16.gmra.mxu0 %v342
    %v1496 = vpop.f32.mrf.mxu0
    %v1497 = vadd.f32 %v1424, %v1496
    %v1498 = vpop.f32.mrf.mxu0
    %v1499 = vadd.f32 %v1426, %v1498
    %1500 = vmatmul.bf16.gmra.mxu0 %v350
    %v1501 = vpop.f32.mrf.mxu0
    %v1502 = vadd.f32 %v1429, %v1501
    %v1503 = vpop.f32.mrf.mxu0
    %v1504 = vadd.f32 %v1431, %v1503
    %1505 = vmatmul.bf16.gmra.mxu0 %v358
    %v1506 = vpop.f32.mrf.mxu0
    %v1507 = vadd.f32 %v1434, %v1506
    %v1508 = vpop.f32.mrf.mxu0
    %v1509 = vadd.f32 %v1436, %v1508
    %1510 = vmatmul.bf16.gmra.mxu0 %v366
    %v1511 = vpop.f32.mrf.mxu0
    %v1512 = vadd.f32 %v1439, %v1511
    %v1513 = vpop.f32.mrf.mxu0
    %v1514 = vadd.f32 %v1441, %v1513
    %1515 = vmatmul.bf16.gmra.mxu0 %v374
    %v1516 = vpop.f32.mrf.mxu0
    %v1517 = vadd.f32 %v1444, %v1516
    %v1518 = vpop.f32.mrf.mxu0
    %v1519 = vadd.f32 %v1446, %v1518
    %1520 = vmatmul.bf16.gmra.mxu0 %v382
    %v1521 = vpop.f32.mrf.mxu0
    %v1522 = vadd.f32 %v1449, %v1521
    %v1523 = vpop.f32.mrf.mxu0
    %1524 = vdwg.mxu0
    %1525 = vmatpush.bf16.msra.mxu0 %v998
    %1526 = vmatpush.bf16.msra.mxu0 %v996
    %1527 = vmatpush.bf16.msra.mxu0 %v994
    %1528 = vmatpush.bf16.msra.mxu0 %v992
    %1529 = vmatpush.bf16.msra.mxu0 %v990
    %1530 = vmatpush.bf16.msra.mxu0 %v988
    %1531 = vmatpush.bf16.msra.mxu0 %v986
    %1532 = vmatpush.bf16.msra.mxu0 %v984
    %1533 = vmatmul.bf16.gmra.mxu0 %v287
    %v1534 = vpop.f32.mrf.mxu0
    %v1535 = vadd.f32 %v1462, %v1534
    %v1536 = vpop.f32.mrf.mxu0
    %v1537 = vadd.f32 %v1464, %v1536
    %1538 = vmatmul.bf16.gmra.mxu0 %v295
    %v1539 = vpop.f32.mrf.mxu0
    %v1540 = vadd.f32 %v1467, %v1539
    %v1541 = vpop.f32.mrf.mxu0
    %v1542 = vadd.f32 %v1469, %v1541
    %1543 = vmatmul.bf16.gmra.mxu0 %v303
    %v1544 = vpop.f32.mrf.mxu0
    %v1545 = vadd.f32 %v1472, %v1544
    %v1546 = vpop.f32.mrf.mxu0
    %v1547 = vadd.f32 %v1474, %v1546
    %1548 = vmatmul.bf16.gmra.mxu0 %v311
    %v1549 = vpop.f32.mrf.mxu0
    %v1550 = vadd.f32 %v1477, %v1549
    %v1551 = vpop.f32.mrf.mxu0
    %v1552 = vadd.f32 %v1479, %v1551
    %1553 = vmatmul.bf16.gmra.mxu0 %v319
    %v1554 = vpop.f32.mrf.mxu0
    %v1555 = vadd.f32 %v1482, %v1554
    %v1556 = vpop.f32.mrf.mxu0
    %v1557 = vadd.f32 %v1484, %v1556
    %1558 = vmatmul.bf16.gmra.mxu0 %v327
    %v1559 = vpop.f32.mrf.mxu0
    %v1560 = vadd.f32 %v1487, %v1559
    %v1561 = vpop.f32.mrf.mxu0
    %v1562 = vadd.f32 %v1489, %v1561
    %1563 = vmatmul.bf16.gmra.mxu0 %v335
    %v1564 = vpop.f32.mrf.mxu0
    %v1565 = vadd.f32 %v1492, %v1564
    %v1566 = vpop.f32.mrf.mxu0
    %v1567 = vadd.f32 %v1494, %v1566
    %1568 = vmatmul.bf16.gmra.mxu0 %v343
    %v1569 = vpop.f32.mrf.mxu0
    %v1570 = vadd.f32 %v1497, %v1569
    %v1571 = vpop.f32.mrf.mxu0
    %v1572 = vadd.f32 %v1499, %v1571
    %1573 = vmatmul.bf16.gmra.mxu0 %v351
    %v1574 = vpop.f32.mrf.mxu0
    %v1575 = vadd.f32 %v1502, %v1574
    %v1576 = vpop.f32.mrf.mxu0
    %v1577 = vadd.f32 %v1504, %v1576
    %1578 = vmatmul.bf16.gmra.mxu0 %v359
    %v1579 = vpop.f32.mrf.mxu0
    %v1580 = vadd.f32 %v1507, %v1579
    %v1581 = vpop.f32.mrf.mxu0
    %v1582 = vadd.f32 %v1509, %v1581
    %1583 = vmatmul.bf16.gmra.mxu0 %v367
    %v1584 = vpop.f32.mrf.mxu0
    %v1585 = vadd.f32 %v1512, %v1584
    %v1586 = vpop.f32.mrf.mxu0
    %v1587 = vadd.f32 %v1514, %v1586
    %1588 = vmatmul.bf16.gmra.mxu0 %v375
    %v1589 = vpop.f32.mrf.mxu0
    %v1590 = vadd.f32 %v1517, %v1589
    %v1591 = vpop.f32.mrf.mxu0
    %v1592 = vadd.f32 %v1519, %v1591
    %1593 = vmatmul.bf16.gmra.mxu0 %v383
    %v1594 = vpop.f32.mrf.mxu0
    %v1595 = vadd.f32 %v1522, %v1594
    %v1596 = vpop.f32.mrf.mxu0
    %1597 = vdwg.mxu0
    %1598 = vmatpush.bf16.msra.mxu0 %v1014
    %1599 = vmatpush.bf16.msra.mxu0 %v1012
    %1600 = vmatpush.bf16.msra.mxu0 %v1010
    %1601 = vmatpush.bf16.msra.mxu0 %v1008
    %1602 = vmatpush.bf16.msra.mxu0 %v1006
    %1603 = vmatpush.bf16.msra.mxu0 %v1004
    %1604 = vmatpush.bf16.msra.mxu0 %v1002
    %1605 = vmatpush.bf16.msra.mxu0 %v1000
    %1606 = vmatmul.bf16.gmra.mxu0 %v288
    %v1607 = vpop.f32.mrf.mxu0
    %v1608 = vadd.f32 %v1535, %v1607
    %v1609 = vpop.f32.mrf.mxu0
    %v1610 = vadd.f32 %v1537, %v1609
    %1611 = vmatmul.bf16.gmra.mxu0 %v296
    %v1612 = vpop.f32.mrf.mxu0
    %v1613 = vadd.f32 %v1540, %v1612
    %v1614 = vpop.f32.mrf.mxu0
    %v1615 = vadd.f32 %v1542, %v1614
    %1616 = vmatmul.bf16.gmra.mxu0 %v304
    %v1617 = vpop.f32.mrf.mxu0
    %v1618 = vadd.f32 %v1545, %v1617
    %v1619 = vpop.f32.mrf.mxu0
    %v1620 = vadd.f32 %v1547, %v1619
    %1621 = vmatmul.bf16.gmra.mxu0 %v312
    %v1622 = vpop.f32.mrf.mxu0
    %v1623 = vadd.f32 %v1550, %v1622
    %v1624 = vpop.f32.mrf.mxu0
    %v1625 = vadd.f32 %v1552, %v1624
    %1626 = vmatmul.bf16.gmra.mxu0 %v320
    %v1627 = vpop.f32.mrf.mxu0
    %v1628 = vadd.f32 %v1555, %v1627
    %v1629 = vpop.f32.mrf.mxu0
    %v1630 = vadd.f32 %v1557, %v1629
    %1631 = vmatmul.bf16.gmra.mxu0 %v328
    %v1632 = vpop.f32.mrf.mxu0
    %v1633 = vadd.f32 %v1560, %v1632
    %v1634 = vpop.f32.mrf.mxu0
    %v1635 = vadd.f32 %v1562, %v1634
    %1636 = vmatmul.bf16.gmra.mxu0 %v336
    %v1637 = vpop.f32.mrf.mxu0
    %v1638 = vadd.f32 %v1565, %v1637
    %v1639 = vpop.f32.mrf.mxu0
    %v1640 = vadd.f32 %v1567, %v1639
    %1641 = vmatmul.bf16.gmra.mxu0 %v344
    %v1642 = vpop.f32.mrf.mxu0
    %v1643 = vadd.f32 %v1570, %v1642
    %v1644 = vpop.f32.mrf.mxu0
    %v1645 = vadd.f32 %v1572, %v1644
    %1646 = vmatmul.bf16.gmra.mxu0 %v352
    %v1647 = vpop.f32.mrf.mxu0
    %v1648 = vadd.f32 %v1575, %v1647
    %v1649 = vpop.f32.mrf.mxu0
    %v1650 = vadd.f32 %v1577, %v1649
    %1651 = vmatmul.bf16.gmra.mxu0 %v360
    %v1652 = vpop.f32.mrf.mxu0
    %v1653 = vadd.f32 %v1580, %v1652
    %v1654 = vpop.f32.mrf.mxu0
    %v1655 = vadd.f32 %v1582, %v1654
    %1656 = vmatmul.bf16.gmra.mxu0 %v368
    %v1657 = vpop.f32.mrf.mxu0
    %v1658 = vadd.f32 %v1585, %v1657
    %v1659 = vpop.f32.mrf.mxu0
    %v1660 = vadd.f32 %v1587, %v1659
    %1661 = vmatmul.bf16.gmra.mxu0 %v376
    %v1662 = vpop.f32.mrf.mxu0
    %v1663 = vadd.f32 %v1590, %v1662
    %v1664 = vpop.f32.mrf.mxu0
    %v1665 = vadd.f32 %v1592, %v1664
    %1666 = vmatmul.bf16.gmra.mxu0 %v384
    %v1667 = vpop.f32.mrf.mxu0
    %v1668 = vadd.f32 %v1595, %v1667
    %v1669 = vpop.f32.mrf.mxu0
    %1670 = vdwg.mxu0
    %1671 = vmatpush.bf16.msra.mxu0 %v1030
    %1672 = vmatpush.bf16.msra.mxu0 %v1028
    %1673 = vmatpush.bf16.msra.mxu0 %v1026
    %1674 = vmatpush.bf16.msra.mxu0 %v1024
    %1675 = vmatpush.bf16.msra.mxu0 %v1022
    %1676 = vmatpush.bf16.msra.mxu0 %v1020
    %1677 = vmatpush.bf16.msra.mxu0 %v1018
    %1678 = vmatpush.bf16.msra.mxu0 %v1016
    %1679 = vmatmul.bf16.gmra.mxu0 %v289
    %v1680 = vpop.f32.mrf.mxu0
    %v1681 = vadd.f32 %v1608, %v1680
    %v1682 = vpop.f32.mrf.mxu0
    %v1683 = vadd.f32 %v1610, %v1682
    %1684 = vmatmul.bf16.gmra.mxu0 %v297
    %v1685 = vpop.f32.mrf.mxu0
    %v1686 = vadd.f32 %v1613, %v1685
    %v1687 = vpop.f32.mrf.mxu0
    %v1688 = vadd.f32 %v1615, %v1687
    %1689 = vmatmul.bf16.gmra.mxu0 %v305
    %v1690 = vpop.f32.mrf.mxu0
    %v1691 = vadd.f32 %v1618, %v1690
    %v1692 = vpop.f32.mrf.mxu0
    %v1693 = vadd.f32 %v1620, %v1692
    %1694 = vmatmul.bf16.gmra.mxu0 %v313
    %v1695 = vpop.f32.mrf.mxu0
    %v1696 = vadd.f32 %v1623, %v1695
    %v1697 = vpop.f32.mrf.mxu0
    %v1698 = vadd.f32 %v1625, %v1697
    %1699 = vmatmul.bf16.gmra.mxu0 %v321
    %v1700 = vpop.f32.mrf.mxu0
    %v1701 = vadd.f32 %v1628, %v1700
    %v1702 = vpop.f32.mrf.mxu0
    %v1703 = vadd.f32 %v1630, %v1702
    %1704 = vmatmul.bf16.gmra.mxu0 %v329
    %v1705 = vpop.f32.mrf.mxu0
    %v1706 = vadd.f32 %v1633, %v1705
    %v1707 = vpop.f32.mrf.mxu0
    %v1708 = vadd.f32 %v1635, %v1707
    %1709 = vmatmul.bf16.gmra.mxu0 %v337
    %v1710 = vpop.f32.mrf.mxu0
    %v1711 = vadd.f32 %v1638, %v1710
    %v1712 = vpop.f32.mrf.mxu0
    %v1713 = vadd.f32 %v1640, %v1712
    %1714 = vmatmul.bf16.gmra.mxu0 %v345
    %v1715 = vpop.f32.mrf.mxu0
    %v1716 = vadd.f32 %v1643, %v1715
    %v1717 = vpop.f32.mrf.mxu0
    %v1718 = vadd.f32 %v1645, %v1717
    %1719 = vmatmul.bf16.gmra.mxu0 %v353
    %v1720 = vpop.f32.mrf.mxu0
    %v1721 = vadd.f32 %v1648, %v1720
    %v1722 = vpop.f32.mrf.mxu0
    %v1723 = vadd.f32 %v1650, %v1722
    %1724 = vmatmul.bf16.gmra.mxu0 %v361
    %v1725 = vpop.f32.mrf.mxu0
    %v1726 = vadd.f32 %v1653, %v1725
    %v1727 = vpop.f32.mrf.mxu0
    %v1728 = vadd.f32 %v1655, %v1727
    %1729 = vmatmul.bf16.gmra.mxu0 %v369
    %v1730 = vpop.f32.mrf.mxu0
    %v1731 = vadd.f32 %v1658, %v1730
    %v1732 = vpop.f32.mrf.mxu0
    %v1733 = vadd.f32 %v1660, %v1732
    %1734 = vmatmul.bf16.gmra.mxu0 %v377
    %v1735 = vpop.f32.mrf.mxu0
    %v1736 = vadd.f32 %v1663, %v1735
    %v1737 = vpop.f32.mrf.mxu0
    %v1738 = vadd.f32 %v1665, %v1737
    %1739 = vmatmul.bf16.gmra.mxu0 %v385
    %v1740 = vpop.f32.mrf.mxu0
    %v1741 = vadd.f32 %v1668, %v1740
    %v1742 = vpop.f32.mrf.mxu0
    %1743 = vdwg.mxu0
    %1744 = vmatpush.bf16.msra.mxu0 %v919
    %1745 = vmatpush.bf16.msra.mxu0 %v917
    %1746 = vmatpush.bf16.msra.mxu0 %v915
    %1747 = vmatpush.bf16.msra.mxu0 %v913
    %1748 = vmatpush.bf16.msra.mxu0 %v911
    %1749 = vmatpush.bf16.msra.mxu0 %v909
    %1750 = vmatpush.bf16.msra.mxu0 %v907
    %1751 = vmatpush.bf16.msra.mxu0 %v905
    %1752 = vmatmul.bf16.gmra.mxu0 %v282
    %v1753 = vpop.f32.mrf.mxu0
    %v1754 = vadd.f32 %v517, %v1753
    %v1755 = vpop.f32.mrf.mxu0
    %v1756 = vadd.f32 %v517, %v1755
    %1757 = vmatmul.bf16.gmra.mxu0 %v290
    %v1758 = vpop.f32.mrf.mxu0
    %v1759 = vadd.f32 %v517, %v1758
    %v1760 = vpop.f32.mrf.mxu0
    %v1761 = vadd.f32 %v517, %v1760
    %1762 = vmatmul.bf16.gmra.mxu0 %v298
    %v1763 = vpop.f32.mrf.mxu0
    %v1764 = vadd.f32 %v517, %v1763
    %v1765 = vpop.f32.mrf.mxu0
    %v1766 = vadd.f32 %v517, %v1765
    %1767 = vmatmul.bf16.gmra.mxu0 %v306
    %v1768 = vpop.f32.mrf.mxu0
    %v1769 = vadd.f32 %v517, %v1768
    %v1770 = vpop.f32.mrf.mxu0
    %v1771 = vadd.f32 %v517, %v1770
    %1772 = vmatmul.bf16.gmra.mxu0 %v314
    %v1773 = vpop.f32.mrf.mxu0
    %v1774 = vadd.f32 %v517, %v1773
    %v1775 = vpop.f32.mrf.mxu0
    %v1776 = vadd.f32 %v517, %v1775
    %1777 = vmatmul.bf16.gmra.mxu0 %v322
    %v1778 = vpop.f32.mrf.mxu0
    %v1779 = vadd.f32 %v517, %v1778
    %v1780 = vpop.f32.mrf.mxu0
    %v1781 = vadd.f32 %v517, %v1780
    %1782 = vmatmul.bf16.gmra.mxu0 %v330
    %v1783 = vpop.f32.mrf.mxu0
    %v1784 = vadd.f32 %v517, %v1783
    %v1785 = vpop.f32.mrf.mxu0
    %v1786 = vadd.f32 %v517, %v1785
    %1787 = vmatmul.bf16.gmra.mxu0 %v338
    %v1788 = vpop.f32.mrf.mxu0
    %v1789 = vadd.f32 %v517, %v1788
    %v1790 = vpop.f32.mrf.mxu0
    %v1791 = vadd.f32 %v517, %v1790
    %1792 = vmatmul.bf16.gmra.mxu0 %v346
    %v1793 = vpop.f32.mrf.mxu0
    %v1794 = vadd.f32 %v517, %v1793
    %v1795 = vpop.f32.mrf.mxu0
    %v1796 = vadd.f32 %v517, %v1795
    %1797 = vmatmul.bf16.gmra.mxu0 %v354
    %v1798 = vpop.f32.mrf.mxu0
    %v1799 = vadd.f32 %v517, %v1798
    %v1800 = vpop.f32.mrf.mxu0
    %v1801 = vadd.f32 %v517, %v1800
    %1802 = vmatmul.bf16.gmra.mxu0 %v362
    %v1803 = vpop.f32.mrf.mxu0
    %v1804 = vadd.f32 %v517, %v1803
    %v1805 = vpop.f32.mrf.mxu0
    %v1806 = vadd.f32 %v517, %v1805
    %1807 = vmatmul.bf16.gmra.mxu0 %v370
    %v1808 = vpop.f32.mrf.mxu0
    %v1809 = vadd.f32 %v517, %v1808
    %v1810 = vpop.f32.mrf.mxu0
    %v1811 = vadd.f32 %v517, %v1810
    %1812 = vmatmul.bf16.gmra.mxu0 %v378
    %v1813 = vpop.f32.mrf.mxu0
    %v1814 = vadd.f32 %v517, %v1813
    %v1815 = vpop.f32.mrf.mxu0
    %1816 = vdwg.mxu0
    %1817 = vmatpush.bf16.msra.mxu0 %v935
    %1818 = vmatpush.bf16.msra.mxu0 %v933
    %1819 = vmatpush.bf16.msra.mxu0 %v931
    %1820 = vmatpush.bf16.msra.mxu0 %v929
    %1821 = vmatpush.bf16.msra.mxu0 %v927
    %1822 = vmatpush.bf16.msra.mxu0 %v925
    %1823 = vmatpush.bf16.msra.mxu0 %v923
    %1824 = vmatpush.bf16.msra.mxu0 %v921
    %1825 = vmatmul.bf16.gmra.mxu0 %v283
    %v1826 = vpop.f32.mrf.mxu0
    %v1827 = vadd.f32 %v1754, %v1826
    %v1828 = vpop.f32.mrf.mxu0
    %v1829 = vadd.f32 %v1756, %v1828
    %1830 = vmatmul.bf16.gmra.mxu0 %v291
    %v1831 = vpop.f32.mrf.mxu0
    %v1832 = vadd.f32 %v1759, %v1831
    %v1833 = vpop.f32.mrf.mxu0
    %v1834 = vadd.f32 %v1761, %v1833
    %1835 = vmatmul.bf16.gmra.mxu0 %v299
    %v1836 = vpop.f32.mrf.mxu0
    %v1837 = vadd.f32 %v1764, %v1836
    %v1838 = vpop.f32.mrf.mxu0
    %v1839 = vadd.f32 %v1766, %v1838
    %1840 = vmatmul.bf16.gmra.mxu0 %v307
    %v1841 = vpop.f32.mrf.mxu0
    %v1842 = vadd.f32 %v1769, %v1841
    %v1843 = vpop.f32.mrf.mxu0
    %v1844 = vadd.f32 %v1771, %v1843
    %1845 = vmatmul.bf16.gmra.mxu0 %v315
    %v1846 = vpop.f32.mrf.mxu0
    %v1847 = vadd.f32 %v1774, %v1846
    %v1848 = vpop.f32.mrf.mxu0
    %v1849 = vadd.f32 %v1776, %v1848
    %1850 = vmatmul.bf16.gmra.mxu0 %v323
    %v1851 = vpop.f32.mrf.mxu0
    %v1852 = vadd.f32 %v1779, %v1851
    %v1853 = vpop.f32.mrf.mxu0
    %v1854 = vadd.f32 %v1781, %v1853
    %1855 = vmatmul.bf16.gmra.mxu0 %v331
    %v1856 = vpop.f32.mrf.mxu0
    %v1857 = vadd.f32 %v1784, %v1856
    %v1858 = vpop.f32.mrf.mxu0
    %v1859 = vadd.f32 %v1786, %v1858
    %1860 = vmatmul.bf16.gmra.mxu0 %v339
    %v1861 = vpop.f32.mrf.mxu0
    %v1862 = vadd.f32 %v1789, %v1861
    %v1863 = vpop.f32.mrf.mxu0
    %v1864 = vadd.f32 %v1791, %v1863
    %1865 = vmatmul.bf16.gmra.mxu0 %v347
    %v1866 = vpop.f32.mrf.mxu0
    %v1867 = vadd.f32 %v1794, %v1866
    %v1868 = vpop.f32.mrf.mxu0
    %v1869 = vadd.f32 %v1796, %v1868
    %1870 = vmatmul.bf16.gmra.mxu0 %v355
    %v1871 = vpop.f32.mrf.mxu0
    %v1872 = vadd.f32 %v1799, %v1871
    %v1873 = vpop.f32.mrf.mxu0
    %v1874 = vadd.f32 %v1801, %v1873
    %1875 = vmatmul.bf16.gmra.mxu0 %v363
    %v1876 = vpop.f32.mrf.mxu0
    %v1877 = vadd.f32 %v1804, %v1876
    %v1878 = vpop.f32.mrf.mxu0
    %v1879 = vadd.f32 %v1806, %v1878
    %1880 = vmatmul.bf16.gmra.mxu0 %v371
    %v1881 = vpop.f32.mrf.mxu0
    %v1882 = vadd.f32 %v1809, %v1881
    %v1883 = vpop.f32.mrf.mxu0
    %v1884 = vadd.f32 %v1811, %v1883
    %1885 = vmatmul.bf16.gmra.mxu0 %v379
    %v1886 = vpop.f32.mrf.mxu0
    %v1887 = vadd.f32 %v1814, %v1886
    %v1888 = vpop.f32.mrf.mxu0
    %1889 = vdwg.mxu0
    %1890 = vmatpush.bf16.msra.mxu0 %v951
    %1891 = vmatpush.bf16.msra.mxu0 %v949
    %1892 = vmatpush.bf16.msra.mxu0 %v947
    %1893 = vmatpush.bf16.msra.mxu0 %v945
    %1894 = vmatpush.bf16.msra.mxu0 %v943
    %1895 = vmatpush.bf16.msra.mxu0 %v941
    %1896 = vmatpush.bf16.msra.mxu0 %v939
    %1897 = vmatpush.bf16.msra.mxu0 %v937
    %1898 = vmatmul.bf16.gmra.mxu0 %v284
    %v1899 = vpop.f32.mrf.mxu0
    %v1900 = vadd.f32 %v1827, %v1899
    %v1901 = vpop.f32.mrf.mxu0
    %v1902 = vadd.f32 %v1829, %v1901
    %1903 = vmatmul.bf16.gmra.mxu0 %v292
    %v1904 = vpop.f32.mrf.mxu0
    %v1905 = vadd.f32 %v1832, %v1904
    %v1906 = vpop.f32.mrf.mxu0
    %v1907 = vadd.f32 %v1834, %v1906
    %1908 = vmatmul.bf16.gmra.mxu0 %v300
    %v1909 = vpop.f32.mrf.mxu0
    %v1910 = vadd.f32 %v1837, %v1909
    %v1911 = vpop.f32.mrf.mxu0
    %v1912 = vadd.f32 %v1839, %v1911
    %1913 = vmatmul.bf16.gmra.mxu0 %v308
    %v1914 = vpop.f32.mrf.mxu0
    %v1915 = vadd.f32 %v1842, %v1914
    %v1916 = vpop.f32.mrf.mxu0
    %v1917 = vadd.f32 %v1844, %v1916
    %1918 = vmatmul.bf16.gmra.mxu0 %v316
    %v1919 = vpop.f32.mrf.mxu0
    %v1920 = vadd.f32 %v1847, %v1919
    %v1921 = vpop.f32.mrf.mxu0
    %v1922 = vadd.f32 %v1849, %v1921
    %1923 = vmatmul.bf16.gmra.mxu0 %v324
    %v1924 = vpop.f32.mrf.mxu0
    %v1925 = vadd.f32 %v1852, %v1924
    %v1926 = vpop.f32.mrf.mxu0
    %v1927 = vadd.f32 %v1854, %v1926
    %1928 = vmatmul.bf16.gmra.mxu0 %v332
    %v1929 = vpop.f32.mrf.mxu0
    %v1930 = vadd.f32 %v1857, %v1929
    %v1931 = vpop.f32.mrf.mxu0
    %v1932 = vadd.f32 %v1859, %v1931
    %1933 = vmatmul.bf16.gmra.mxu0 %v340
    %v1934 = vpop.f32.mrf.mxu0
    %v1935 = vadd.f32 %v1862, %v1934
    %v1936 = vpop.f32.mrf.mxu0
    %v1937 = vadd.f32 %v1864, %v1936
    %1938 = vmatmul.bf16.gmra.mxu0 %v348
    %v1939 = vpop.f32.mrf.mxu0
    %v1940 = vadd.f32 %v1867, %v1939
    %v1941 = vpop.f32.mrf.mxu0
    %v1942 = vadd.f32 %v1869, %v1941
    %1943 = vmatmul.bf16.gmra.mxu0 %v356
    %v1944 = vpop.f32.mrf.mxu0
    %v1945 = vadd.f32 %v1872, %v1944
    %v1946 = vpop.f32.mrf.mxu0
    %v1947 = vadd.f32 %v1874, %v1946
    %1948 = vmatmul.bf16.gmra.mxu0 %v364
    %v1949 = vpop.f32.mrf.mxu0
    %v1950 = vadd.f32 %v1877, %v1949
    %v1951 = vpop.f32.mrf.mxu0
    %v1952 = vadd.f32 %v1879, %v1951
    %1953 = vmatmul.bf16.gmra.mxu0 %v372
    %v1954 = vpop.f32.mrf.mxu0
    %v1955 = vadd.f32 %v1882, %v1954
    %v1956 = vpop.f32.mrf.mxu0
    %v1957 = vadd.f32 %v1884, %v1956
    %1958 = vmatmul.bf16.gmra.mxu0 %v380
    %v1959 = vpop.f32.mrf.mxu0
    %v1960 = vadd.f32 %v1887, %v1959
    %v1961 = vpop.f32.mrf.mxu0
    %1962 = vdwg.mxu0
    %1963 = vmatpush.bf16.msra.mxu0 %v967
    %1964 = vmatpush.bf16.msra.mxu0 %v965
    %1965 = vmatpush.bf16.msra.mxu0 %v963
    %1966 = vmatpush.bf16.msra.mxu0 %v961
    %1967 = vmatpush.bf16.msra.mxu0 %v959
    %1968 = vmatpush.bf16.msra.mxu0 %v957
    %1969 = vmatpush.bf16.msra.mxu0 %v955
    %1970 = vmatpush.bf16.msra.mxu0 %v953
    %1971 = vmatmul.bf16.gmra.mxu0 %v285
    %v1972 = vpop.f32.mrf.mxu0
    %v1973 = vadd.f32 %v1900, %v1972
    %v1974 = vpop.f32.mrf.mxu0
    %v1975 = vadd.f32 %v1902, %v1974
    %1976 = vmatmul.bf16.gmra.mxu0 %v293
    %v1977 = vpop.f32.mrf.mxu0
    %v1978 = vadd.f32 %v1905, %v1977
    %v1979 = vpop.f32.mrf.mxu0
    %v1980 = vadd.f32 %v1907, %v1979
    %1981 = vmatmul.bf16.gmra.mxu0 %v301
    %v1982 = vpop.f32.mrf.mxu0
    %v1983 = vadd.f32 %v1910, %v1982
    %v1984 = vpop.f32.mrf.mxu0
    %v1985 = vadd.f32 %v1912, %v1984
    %1986 = vmatmul.bf16.gmra.mxu0 %v309
    %v1987 = vpop.f32.mrf.mxu0
    %v1988 = vadd.f32 %v1915, %v1987
    %v1989 = vpop.f32.mrf.mxu0
    %v1990 = vadd.f32 %v1917, %v1989
    %1991 = vmatmul.bf16.gmra.mxu0 %v317
    %v1992 = vpop.f32.mrf.mxu0
    %v1993 = vadd.f32 %v1920, %v1992
    %v1994 = vpop.f32.mrf.mxu0
    %v1995 = vadd.f32 %v1922, %v1994
    %1996 = vmatmul.bf16.gmra.mxu0 %v325
    %v1997 = vpop.f32.mrf.mxu0
    %v1998 = vadd.f32 %v1925, %v1997
    %v1999 = vpop.f32.mrf.mxu0
    %v2000 = vadd.f32 %v1927, %v1999
    %2001 = vmatmul.bf16.gmra.mxu0 %v333
    %v2002 = vpop.f32.mrf.mxu0
    %v2003 = vadd.f32 %v1930, %v2002
    %v2004 = vpop.f32.mrf.mxu0
    %v2005 = vadd.f32 %v1932, %v2004
    %2006 = vmatmul.bf16.gmra.mxu0 %v341
    %v2007 = vpop.f32.mrf.mxu0
    %v2008 = vadd.f32 %v1935, %v2007
    %v2009 = vpop.f32.mrf.mxu0
    %v2010 = vadd.f32 %v1937, %v2009
    %2011 = vmatmul.bf16.gmra.mxu0 %v349
    %v2012 = vpop.f32.mrf.mxu0
    %v2013 = vadd.f32 %v1940, %v2012
    %v2014 = vpop.f32.mrf.mxu0
    %v2015 = vadd.f32 %v1942, %v2014
    %2016 = vmatmul.bf16.gmra.mxu0 %v357
    %v2017 = vpop.f32.mrf.mxu0
    %v2018 = vadd.f32 %v1945, %v2017
    %v2019 = vpop.f32.mrf.mxu0
    %v2020 = vadd.f32 %v1947, %v2019
    %2021 = vmatmul.bf16.gmra.mxu0 %v365
    %v2022 = vpop.f32.mrf.mxu0
    %v2023 = vadd.f32 %v1950, %v2022
    %v2024 = vpop.f32.mrf.mxu0
    %v2025 = vadd.f32 %v1952, %v2024
    %2026 = vmatmul.bf16.gmra.mxu0 %v373
    %v2027 = vpop.f32.mrf.mxu0
    %v2028 = vadd.f32 %v1955, %v2027
    %v2029 = vpop.f32.mrf.mxu0
    %v2030 = vadd.f32 %v1957, %v2029
    %2031 = vmatmul.bf16.gmra.mxu0 %v381
    %v2032 = vpop.f32.mrf.mxu0
    %v2033 = vadd.f32 %v1960, %v2032
    %v2034 = vpop.f32.mrf.mxu0
    %2035 = vdwg.mxu0
    %2036 = vmatpush.bf16.msra.mxu0 %v983
    %2037 = vmatpush.bf16.msra.mxu0 %v981
    %2038 = vmatpush.bf16.msra.mxu0 %v979
    %2039 = vmatpush.bf16.msra.mxu0 %v977
    %2040 = vmatpush.bf16.msra.mxu0 %v975
    %2041 = vmatpush.bf16.msra.mxu0 %v973
    %2042 = vmatpush.bf16.msra.mxu0 %v971
    %2043 = vmatpush.bf16.msra.mxu0 %v969
    %2044 = vmatmul.bf16.gmra.mxu0 %v286
    %v2045 = vpop.f32.mrf.mxu0
    %v2046 = vadd.f32 %v1973, %v2045
    %v2047 = vpop.f32.mrf.mxu0
    %v2048 = vadd.f32 %v1975, %v2047
    %2049 = vmatmul.bf16.gmra.mxu0 %v294
    %v2050 = vpop.f32.mrf.mxu0
    %v2051 = vadd.f32 %v1978, %v2050
    %v2052 = vpop.f32.mrf.mxu0
    %v2053 = vadd.f32 %v1980, %v2052
    %2054 = vmatmul.bf16.gmra.mxu0 %v302
    %v2055 = vpop.f32.mrf.mxu0
    %v2056 = vadd.f32 %v1983, %v2055
    %v2057 = vpop.f32.mrf.mxu0
    %v2058 = vadd.f32 %v1985, %v2057
    %2059 = vmatmul.bf16.gmra.mxu0 %v310
    %v2060 = vpop.f32.mrf.mxu0
    %v2061 = vadd.f32 %v1988, %v2060
    %v2062 = vpop.f32.mrf.mxu0
    %v2063 = vadd.f32 %v1990, %v2062
    %2064 = vmatmul.bf16.gmra.mxu0 %v318
    %v2065 = vpop.f32.mrf.mxu0
    %v2066 = vadd.f32 %v1993, %v2065
    %v2067 = vpop.f32.mrf.mxu0
    %v2068 = vadd.f32 %v1995, %v2067
    %2069 = vmatmul.bf16.gmra.mxu0 %v326
    %v2070 = vpop.f32.mrf.mxu0
    %v2071 = vadd.f32 %v1998, %v2070
    %v2072 = vpop.f32.mrf.mxu0
    %v2073 = vadd.f32 %v2000, %v2072
    %2074 = vmatmul.bf16.gmra.mxu0 %v334
    %v2075 = vpop.f32.mrf.mxu0
    %v2076 = vadd.f32 %v2003, %v2075
    %v2077 = vpop.f32.mrf.mxu0
    %v2078 = vadd.f32 %v2005, %v2077
    %2079 = vmatmul.bf16.gmra.mxu0 %v342
    %v2080 = vpop.f32.mrf.mxu0
    %v2081 = vadd.f32 %v2008, %v2080
    %v2082 = vpop.f32.mrf.mxu0
    %v2083 = vadd.f32 %v2010, %v2082
    %2084 = vmatmul.bf16.gmra.mxu0 %v350
    %v2085 = vpop.f32.mrf.mxu0
    %v2086 = vadd.f32 %v2013, %v2085
    %v2087 = vpop.f32.mrf.mxu0
    %v2088 = vadd.f32 %v2015, %v2087
    %2089 = vmatmul.bf16.gmra.mxu0 %v358
    %v2090 = vpop.f32.mrf.mxu0
    %v2091 = vadd.f32 %v2018, %v2090
    %v2092 = vpop.f32.mrf.mxu0
    %v2093 = vadd.f32 %v2020, %v2092
    %2094 = vmatmul.bf16.gmra.mxu0 %v366
    %v2095 = vpop.f32.mrf.mxu0
    %v2096 = vadd.f32 %v2023, %v2095
    %v2097 = vpop.f32.mrf.mxu0
    %v2098 = vadd.f32 %v2025, %v2097
    %2099 = vmatmul.bf16.gmra.mxu0 %v374
    %v2100 = vpop.f32.mrf.mxu0
    %v2101 = vadd.f32 %v2028, %v2100
    %v2102 = vpop.f32.mrf.mxu0
    %v2103 = vadd.f32 %v2030, %v2102
    %2104 = vmatmul.bf16.gmra.mxu0 %v382
    %v2105 = vpop.f32.mrf.mxu0
    %v2106 = vadd.f32 %v2033, %v2105
    %v2107 = vpop.f32.mrf.mxu0
    %2108 = vdwg.mxu0
    %2109 = vmatpush.bf16.msra.mxu0 %v999
    %2110 = vmatpush.bf16.msra.mxu0 %v997
    %2111 = vmatpush.bf16.msra.mxu0 %v995
    %2112 = vmatpush.bf16.msra.mxu0 %v993
    %2113 = vmatpush.bf16.msra.mxu0 %v991
    %2114 = vmatpush.bf16.msra.mxu0 %v989
    %2115 = vmatpush.bf16.msra.mxu0 %v987
    %2116 = vmatpush.bf16.msra.mxu0 %v985
    %2117 = vmatmul.bf16.gmra.mxu0 %v287
    %v2118 = vpop.f32.mrf.mxu0
    %v2119 = vadd.f32 %v2046, %v2118
    %v2120 = vpop.f32.mrf.mxu0
    %v2121 = vadd.f32 %v2048, %v2120
    %2122 = vmatmul.bf16.gmra.mxu0 %v295
    %v2123 = vpop.f32.mrf.mxu0
    %v2124 = vadd.f32 %v2051, %v2123
    %v2125 = vpop.f32.mrf.mxu0
    %v2126 = vadd.f32 %v2053, %v2125
    %2127 = vmatmul.bf16.gmra.mxu0 %v303
    %v2128 = vpop.f32.mrf.mxu0
    %v2129 = vadd.f32 %v2056, %v2128
    %v2130 = vpop.f32.mrf.mxu0
    %v2131 = vadd.f32 %v2058, %v2130
    %2132 = vmatmul.bf16.gmra.mxu0 %v311
    %v2133 = vpop.f32.mrf.mxu0
    %v2134 = vadd.f32 %v2061, %v2133
    %v2135 = vpop.f32.mrf.mxu0
    %v2136 = vadd.f32 %v2063, %v2135
    %2137 = vmatmul.bf16.gmra.mxu0 %v319
    %v2138 = vpop.f32.mrf.mxu0
    %v2139 = vadd.f32 %v2066, %v2138
    %v2140 = vpop.f32.mrf.mxu0
    %v2141 = vadd.f32 %v2068, %v2140
    %2142 = vmatmul.bf16.gmra.mxu0 %v327
    %v2143 = vpop.f32.mrf.mxu0
    %v2144 = vadd.f32 %v2071, %v2143
    %v2145 = vpop.f32.mrf.mxu0
    %v2146 = vadd.f32 %v2073, %v2145
    %2147 = vmatmul.bf16.gmra.mxu0 %v335
    %v2148 = vpop.f32.mrf.mxu0
    %v2149 = vadd.f32 %v2076, %v2148
    %v2150 = vpop.f32.mrf.mxu0
    %v2151 = vadd.f32 %v2078, %v2150
    %2152 = vmatmul.bf16.gmra.mxu0 %v343
    %v2153 = vpop.f32.mrf.mxu0
    %v2154 = vadd.f32 %v2081, %v2153
    %v2155 = vpop.f32.mrf.mxu0
    %v2156 = vadd.f32 %v2083, %v2155
    %2157 = vmatmul.bf16.gmra.mxu0 %v351
    %v2158 = vpop.f32.mrf.mxu0
    %v2159 = vadd.f32 %v2086, %v2158
    %v2160 = vpop.f32.mrf.mxu0
    %v2161 = vadd.f32 %v2088, %v2160
    %2162 = vmatmul.bf16.gmra.mxu0 %v359
    %v2163 = vpop.f32.mrf.mxu0
    %v2164 = vadd.f32 %v2091, %v2163
    %v2165 = vpop.f32.mrf.mxu0
    %v2166 = vadd.f32 %v2093, %v2165
    %2167 = vmatmul.bf16.gmra.mxu0 %v367
    %v2168 = vpop.f32.mrf.mxu0
    %v2169 = vadd.f32 %v2096, %v2168
    %v2170 = vpop.f32.mrf.mxu0
    %v2171 = vadd.f32 %v2098, %v2170
    %2172 = vmatmul.bf16.gmra.mxu0 %v375
    %v2173 = vpop.f32.mrf.mxu0
    %v2174 = vadd.f32 %v2101, %v2173
    %v2175 = vpop.f32.mrf.mxu0
    %v2176 = vadd.f32 %v2103, %v2175
    %2177 = vmatmul.bf16.gmra.mxu0 %v383
    %v2178 = vpop.f32.mrf.mxu0
    %v2179 = vadd.f32 %v2106, %v2178
    %v2180 = vpop.f32.mrf.mxu0
    %2181 = vdwg.mxu0
    %2182 = vmatpush.bf16.msra.mxu0 %v1015
    %2183 = vmatpush.bf16.msra.mxu0 %v1013
    %2184 = vmatpush.bf16.msra.mxu0 %v1011
    %2185 = vmatpush.bf16.msra.mxu0 %v1009
    %2186 = vmatpush.bf16.msra.mxu0 %v1007
    %2187 = vmatpush.bf16.msra.mxu0 %v1005
    %2188 = vmatpush.bf16.msra.mxu0 %v1003
    %2189 = vmatpush.bf16.msra.mxu0 %v1001
    %2190 = vmatmul.bf16.gmra.mxu0 %v288
    %v2191 = vpop.f32.mrf.mxu0
    %v2192 = vadd.f32 %v2119, %v2191
    %v2193 = vpop.f32.mrf.mxu0
    %v2194 = vadd.f32 %v2121, %v2193
    %2195 = vmatmul.bf16.gmra.mxu0 %v296
    %v2196 = vpop.f32.mrf.mxu0
    %v2197 = vadd.f32 %v2124, %v2196
    %v2198 = vpop.f32.mrf.mxu0
    %v2199 = vadd.f32 %v2126, %v2198
    %2200 = vmatmul.bf16.gmra.mxu0 %v304
    %v2201 = vpop.f32.mrf.mxu0
    %v2202 = vadd.f32 %v2129, %v2201
    %v2203 = vpop.f32.mrf.mxu0
    %v2204 = vadd.f32 %v2131, %v2203
    %2205 = vmatmul.bf16.gmra.mxu0 %v312
    %v2206 = vpop.f32.mrf.mxu0
    %v2207 = vadd.f32 %v2134, %v2206
    %v2208 = vpop.f32.mrf.mxu0
    %v2209 = vadd.f32 %v2136, %v2208
    %2210 = vmatmul.bf16.gmra.mxu0 %v320
    %v2211 = vpop.f32.mrf.mxu0
    %v2212 = vadd.f32 %v2139, %v2211
    %v2213 = vpop.f32.mrf.mxu0
    %v2214 = vadd.f32 %v2141, %v2213
    %2215 = vmatmul.bf16.gmra.mxu0 %v328
    %v2216 = vpop.f32.mrf.mxu0
    %v2217 = vadd.f32 %v2144, %v2216
    %v2218 = vpop.f32.mrf.mxu0
    %v2219 = vadd.f32 %v2146, %v2218
    %2220 = vmatmul.bf16.gmra.mxu0 %v336
    %v2221 = vpop.f32.mrf.mxu0
    %v2222 = vadd.f32 %v2149, %v2221
    %v2223 = vpop.f32.mrf.mxu0
    %v2224 = vadd.f32 %v2151, %v2223
    %2225 = vmatmul.bf16.gmra.mxu0 %v344
    %v2226 = vpop.f32.mrf.mxu0
    %v2227 = vadd.f32 %v2154, %v2226
    %v2228 = vpop.f32.mrf.mxu0
    %v2229 = vadd.f32 %v2156, %v2228
    %2230 = vmatmul.bf16.gmra.mxu0 %v352
    %v2231 = vpop.f32.mrf.mxu0
    %v2232 = vadd.f32 %v2159, %v2231
    %v2233 = vpop.f32.mrf.mxu0
    %v2234 = vadd.f32 %v2161, %v2233
    %2235 = vmatmul.bf16.gmra.mxu0 %v360
    %v2236 = vpop.f32.mrf.mxu0
    %v2237 = vadd.f32 %v2164, %v2236
    %v2238 = vpop.f32.mrf.mxu0
    %v2239 = vadd.f32 %v2166, %v2238
    %2240 = vmatmul.bf16.gmra.mxu0 %v368
    %v2241 = vpop.f32.mrf.mxu0
    %v2242 = vadd.f32 %v2169, %v2241
    %v2243 = vpop.f32.mrf.mxu0
    %v2244 = vadd.f32 %v2171, %v2243
    %2245 = vmatmul.bf16.gmra.mxu0 %v376
    %v2246 = vpop.f32.mrf.mxu0
    %v2247 = vadd.f32 %v2174, %v2246
    %v2248 = vpop.f32.mrf.mxu0
    %v2249 = vadd.f32 %v2176, %v2248
    %2250 = vmatmul.bf16.gmra.mxu0 %v384
    %v2251 = vpop.f32.mrf.mxu0
    %v2252 = vadd.f32 %v2179, %v2251
    %v2253 = vpop.f32.mrf.mxu0
    %2254 = vdwg.mxu0
    %2255 = vmatpush.bf16.msra.mxu0 %v1031
    %2256 = vmatpush.bf16.msra.mxu0 %v1029
    %2257 = vmatpush.bf16.msra.mxu0 %v1027
    %2258 = vmatpush.bf16.msra.mxu0 %v1025
    %2259 = vmatpush.bf16.msra.mxu0 %v1023
    %2260 = vmatpush.bf16.msra.mxu0 %v1021
    %2261 = vmatpush.bf16.msra.mxu0 %v1019
    %2262 = vmatpush.bf16.msra.mxu0 %v1017
    %2263 = vmatmul.bf16.gmra.mxu0 %v289
    %v2264 = vpop.f32.mrf.mxu0
    %v2265 = vadd.f32 %v2192, %v2264
    %v2266 = vpop.f32.mrf.mxu0
    %v2267 = vadd.f32 %v2194, %v2266
    %2268 = vmatmul.bf16.gmra.mxu0 %v297
    %v2269 = vpop.f32.mrf.mxu0
    %v2270 = vadd.f32 %v2197, %v2269
    %v2271 = vpop.f32.mrf.mxu0
    %v2272 = vadd.f32 %v2199, %v2271
    %2273 = vmatmul.bf16.gmra.mxu0 %v305
    %v2274 = vpop.f32.mrf.mxu0
    %v2275 = vadd.f32 %v2202, %v2274
    %v2276 = vpop.f32.mrf.mxu0
    %v2277 = vadd.f32 %v2204, %v2276
    %2278 = vmatmul.bf16.gmra.mxu0 %v313
    %v2279 = vpop.f32.mrf.mxu0
    %v2280 = vadd.f32 %v2207, %v2279
    %v2281 = vpop.f32.mrf.mxu0
    %v2282 = vadd.f32 %v2209, %v2281
    %2283 = vmatmul.bf16.gmra.mxu0 %v321
    %v2284 = vpop.f32.mrf.mxu0
    %v2285 = vadd.f32 %v2212, %v2284
    %v2286 = vpop.f32.mrf.mxu0
    %v2287 = vadd.f32 %v2214, %v2286
    %2288 = vmatmul.bf16.gmra.mxu0 %v329
    %v2289 = vpop.f32.mrf.mxu0
    %v2290 = vadd.f32 %v2217, %v2289
    %v2291 = vpop.f32.mrf.mxu0
    %v2292 = vadd.f32 %v2219, %v2291
    %2293 = vmatmul.bf16.gmra.mxu0 %v337
    %v2294 = vpop.f32.mrf.mxu0
    %v2295 = vadd.f32 %v2222, %v2294
    %v2296 = vpop.f32.mrf.mxu0
    %v2297 = vadd.f32 %v2224, %v2296
    %2298 = vmatmul.bf16.gmra.mxu0 %v345
    %v2299 = vpop.f32.mrf.mxu0
    %v2300 = vadd.f32 %v2227, %v2299
    %v2301 = vpop.f32.mrf.mxu0
    %v2302 = vadd.f32 %v2229, %v2301
    %2303 = vmatmul.bf16.gmra.mxu0 %v353
    %v2304 = vpop.f32.mrf.mxu0
    %v2305 = vadd.f32 %v2232, %v2304
    %v2306 = vpop.f32.mrf.mxu0
    %v2307 = vadd.f32 %v2234, %v2306
    %2308 = vmatmul.bf16.gmra.mxu0 %v361
    %v2309 = vpop.f32.mrf.mxu0
    %v2310 = vadd.f32 %v2237, %v2309
    %v2311 = vpop.f32.mrf.mxu0
    %v2312 = vadd.f32 %v2239, %v2311
    %2313 = vmatmul.bf16.gmra.mxu0 %v369
    %v2314 = vpop.f32.mrf.mxu0
    %v2315 = vadd.f32 %v2242, %v2314
    %v2316 = vpop.f32.mrf.mxu0
    %v2317 = vadd.f32 %v2244, %v2316
    %2318 = vmatmul.bf16.gmra.mxu0 %v377
    %v2319 = vpop.f32.mrf.mxu0
    %v2320 = vadd.f32 %v2247, %v2319
    %v2321 = vpop.f32.mrf.mxu0
    %v2322 = vadd.f32 %v2249, %v2321
    %2323 = vmatmul.bf16.gmra.mxu0 %v385
    %v2324 = vpop.f32.mrf.mxu0
    %v2325 = vadd.f32 %v2252, %v2324
    %v2326 = vpop.f32.mrf.mxu0
    %2327 = vdwg.mxu0
    %vm2328 = vcmp.ge.f32.partialorder %v1681, 0.0
    %vm2329 = vcmp.ge.f32.partialorder %v2265, 0.0
    %vm2330 = vcmp.ge.f32.partialorder %v1683, 0.0
    %vm2331 = vcmp.ge.f32.partialorder %v2267, 0.0
    %vm2332 = vcmp.ge.f32.partialorder %v1686, 0.0
    %vm2333 = vcmp.ge.f32.partialorder %v2270, 0.0
    %vm2334 = vcmp.ge.f32.partialorder %v1688, 0.0
    %vm2335 = vcmp.ge.f32.partialorder %v2272, 0.0
    %vm2336 = vcmp.ge.f32.partialorder %v1691, 0.0
    %vm2337 = vcmp.ge.f32.partialorder %v2275, 0.0
    %vm2338 = vcmp.ge.f32.partialorder %v1693, 0.0
    %vm2339 = vcmp.ge.f32.partialorder %v2277, 0.0
    %vm2340 = vcmp.ge.f32.partialorder %v1696, 0.0
    %vm2341 = vcmp.ge.f32.partialorder %v2280, 0.0
    %vm2342 = vcmp.ge.f32.partialorder %v1698, 0.0
    %vm2343 = vcmp.ge.f32.partialorder %v2282, 0.0
    %vm2344 = vcmp.ge.f32.partialorder %v1701, 0.0
    %vm2345 = vcmp.ge.f32.partialorder %v2285, 0.0
    %vm2346 = vcmp.ge.f32.partialorder %v1703, 0.0
    %vm2347 = vcmp.ge.f32.partialorder %v2287, 0.0
    %vm2348 = vcmp.ge.f32.partialorder %v1706, 0.0
    %vm2349 = vcmp.ge.f32.partialorder %v2290, 0.0
    %vm2350 = vcmp.ge.f32.partialorder %v1708, 0.0
    %vm2351 = vcmp.ge.f32.partialorder %v2292, 0.0
    %vm2352 = vcmp.ge.f32.partialorder %v1711, 0.0
    %vm2353 = vcmp.ge.f32.partialorder %v2295, 0.0
    %vm2354 = vcmp.ge.f32.partialorder %v1713, 0.0
    %vm2355 = vcmp.ge.f32.partialorder %v2297, 0.0
    %vm2356 = vcmp.ge.f32.partialorder %v1716, 0.0
    %vm2357 = vcmp.ge.f32.partialorder %v2300, 0.0
    %vm2358 = vcmp.ge.f32.partialorder %v1718, 0.0
    %vm2359 = vcmp.ge.f32.partialorder %v2302, 0.0
    %vm2360 = vcmp.ge.f32.partialorder %v1721, 0.0
    %vm2361 = vcmp.ge.f32.partialorder %v2305, 0.0
    %vm2362 = vcmp.ge.f32.partialorder %v1723, 0.0
    %vm2363 = vcmp.ge.f32.partialorder %v2307, 0.0
    %vm2364 = vcmp.ge.f32.partialorder %v1726, 0.0
    %vm2365 = vcmp.ge.f32.partialorder %v2310, 0.0
    %vm2366 = vcmp.ge.f32.partialorder %v1728, 0.0
    %vm2367 = vcmp.ge.f32.partialorder %v2312, 0.0
    %vm2368 = vcmp.ge.f32.partialorder %v1731, 0.0
    %vm2369 = vcmp.ge.f32.partialorder %v2315, 0.0
    %vm2370 = vcmp.ge.f32.partialorder %v1733, 0.0
    %vm2371 = vcmp.ge.f32.partialorder %v2317, 0.0
    %vm2372 = vcmp.ge.f32.partialorder %v1736, 0.0
    %vm2373 = vcmp.ge.f32.partialorder %v2320, 0.0
    %vm2374 = vcmp.ge.f32.partialorder %v1738, 0.0
    %vm2375 = vcmp.ge.f32.partialorder %v2322, 0.0
    %vm2376 = vcmp.ge.f32.partialorder %v1741, 0.0
    %vm2377 = vcmp.ge.f32.partialorder %v2325, 0.0
    %v2378 = vmul.f32 %v1681, 0.01
    %v2379 = vmul.f32 %v2265, 0.01
    %v2380 = vmul.f32 %v1683, 0.01
    %v2381 = vmul.f32 %v2267, 0.01
    %v2382 = vmul.f32 %v1686, 0.01
    %v2383 = vmul.f32 %v2270, 0.01
    %v2384 = vmul.f32 %v1688, 0.01
    %v2385 = vmul.f32 %v2272, 0.01
    %v2386 = vmul.f32 %v1691, 0.01
    %v2387 = vmul.f32 %v2275, 0.01
    %v2388 = vmul.f32 %v1693, 0.01
    %v2389 = vmul.f32 %v2277, 0.01
    %v2390 = vmul.f32 %v1696, 0.01
    %v2391 = vmul.f32 %v2280, 0.01
    %v2392 = vmul.f32 %v1698, 0.01
    %v2393 = vmul.f32 %v2282, 0.01
    %v2394 = vmul.f32 %v1701, 0.01
    %v2395 = vmul.f32 %v2285, 0.01
    %v2396 = vmul.f32 %v1703, 0.01
    %v2397 = vmul.f32 %v2287, 0.01
    %v2398 = vmul.f32 %v1706, 0.01
    %v2399 = vmul.f32 %v2290, 0.01
    %v2400 = vmul.f32 %v1708, 0.01
    %v2401 = vmul.f32 %v2292, 0.01
    %v2402 = vmul.f32 %v1711, 0.01
    %v2403 = vmul.f32 %v2295, 0.01
    %v2404 = vmul.f32 %v1713, 0.01
    %v2405 = vmul.f32 %v2297, 0.01
    %v2406 = vmul.f32 %v1716, 0.01
    %v2407 = vmul.f32 %v2300, 0.01
    %v2408 = vmul.f32 %v1718, 0.01
    %v2409 = vmul.f32 %v2302, 0.01
    %v2410 = vmul.f32 %v1721, 0.01
    %v2411 = vmul.f32 %v2305, 0.01
    %v2412 = vmul.f32 %v1723, 0.01
    %v2413 = vmul.f32 %v2307, 0.01
    %v2414 = vmul.f32 %v1726, 0.01
    %v2415 = vmul.f32 %v2310, 0.01
    %v2416 = vmul.f32 %v1728, 0.01
    %v2417 = vmul.f32 %v2312, 0.01
    %v2418 = vmul.f32 %v1731, 0.01
    %v2419 = vmul.f32 %v2315, 0.01
    %v2420 = vmul.f32 %v1733, 0.01
    %v2421 = vmul.f32 %v2317, 0.01
    %v2422 = vmul.f32 %v1736, 0.01
    %v2423 = vmul.f32 %v2320, 0.01
    %v2424 = vmul.f32 %v1738, 0.01
    %v2425 = vmul.f32 %v2322, 0.01
    %v2426 = vmul.f32 %v1741, 0.01
    %v2427 = vmul.f32 %v2325, 0.01
    %v2428 = vsel %vm2328, %v1681, %v2378
    %v2429 = vsel %vm2329, %v2265, %v2379
    %v2430 = vsel %vm2330, %v1683, %v2380
    %v2431 = vsel %vm2331, %v2267, %v2381
    %v2432 = vsel %vm2332, %v1686, %v2382
    %v2433 = vsel %vm2333, %v2270, %v2383
    %v2434 = vsel %vm2334, %v1688, %v2384
    %v2435 = vsel %vm2335, %v2272, %v2385
    %v2436 = vsel %vm2336, %v1691, %v2386
    %v2437 = vsel %vm2337, %v2275, %v2387
    %v2438 = vsel %vm2338, %v1693, %v2388
    %v2439 = vsel %vm2339, %v2277, %v2389
    %v2440 = vsel %vm2340, %v1696, %v2390
    %v2441 = vsel %vm2341, %v2280, %v2391
    %v2442 = vsel %vm2342, %v1698, %v2392
    %v2443 = vsel %vm2343, %v2282, %v2393
    %v2444 = vsel %vm2344, %v1701, %v2394
    %v2445 = vsel %vm2345, %v2285, %v2395
    %v2446 = vsel %vm2346, %v1703, %v2396
    %v2447 = vsel %vm2347, %v2287, %v2397
    %v2448 = vsel %vm2348, %v1706, %v2398
    %v2449 = vsel %vm2349, %v2290, %v2399
    %v2450 = vsel %vm2350, %v1708, %v2400
    %v2451 = vsel %vm2351, %v2292, %v2401
    %v2452 = vsel %vm2352, %v1711, %v2402
    %v2453 = vsel %vm2353, %v2295, %v2403
    %v2454 = vsel %vm2354, %v1713, %v2404
    %v2455 = vsel %vm2355, %v2297, %v2405
    %v2456 = vsel %vm2356, %v1716, %v2406
    %v2457 = vsel %vm2357, %v2300, %v2407
    %v2458 = vsel %vm2358, %v1718, %v2408
    %v2459 = vsel %vm2359, %v2302, %v2409
    %v2460 = vsel %vm2360, %v1721, %v2410
    %v2461 = vsel %vm2361, %v2305, %v2411
    %v2462 = vsel %vm2362, %v1723, %v2412
    %v2463 = vsel %vm2363, %v2307, %v2413
    %v2464 = vsel %vm2364, %v1726, %v2414
    %v2465 = vsel %vm2365, %v2310, %v2415
    %v2466 = vsel %vm2366, %v1728, %v2416
    %v2467 = vsel %vm2367, %v2312, %v2417
    %v2468 = vsel %vm2368, %v1731, %v2418
    %v2469 = vsel %vm2369, %v2315, %v2419
    %v2470 = vsel %vm2370, %v1733, %v2420
    %v2471 = vsel %vm2371, %v2317, %v2421
    %v2472 = vsel %vm2372, %v1736, %v2422
    %v2473 = vsel %vm2373, %v2320, %v2423
    %v2474 = vsel %vm2374, %v1738, %v2424
    %v2475 = vsel %vm2375, %v2322, %v2425
    %v2476 = vsel %vm2376, %v1741, %v2426
    %v2477 = vsel %vm2377, %v2325, %v2427
    %v2478 = vpack.c.bf16 %v2430, %v2428
    %v2479 = vpack.c.bf16 %v2431, %v2429
    %v2480 = vpack.c.bf16 %v2434, %v2432
    %v2481 = vpack.c.bf16 %v2435, %v2433
    %v2482 = vpack.c.bf16 %v2438, %v2436
    %v2483 = vpack.c.bf16 %v2439, %v2437
    %v2484 = vpack.c.bf16 %v2442, %v2440
    %v2485 = vpack.c.bf16 %v2443, %v2441
    %v2486 = vpack.c.bf16 %v2446, %v2444
    %v2487 = vpack.c.bf16 %v2447, %v2445
    %v2488 = vpack.c.bf16 %v2450, %v2448
    %v2489 = vpack.c.bf16 %v2451, %v2449
    %v2490 = vpack.c.bf16 %v2454, %v2452
    %v2491 = vpack.c.bf16 %v2455, %v2453
    %v2492 = vpack.c.bf16 %v2458, %v2456
    %v2493 = vpack.c.bf16 %v2459, %v2457
    %v2494 = vpack.c.bf16 %v2462, %v2460
    %v2495 = vpack.c.bf16 %v2463, %v2461
    %v2496 = vpack.c.bf16 %v2466, %v2464
    %v2497 = vpack.c.bf16 %v2467, %v2465
    %v2498 = vpack.c.bf16 %v2470, %v2468
    %v2499 = vpack.c.bf16 %v2471, %v2469
    %v2500 = vpack.c.bf16 %v2474, %v2472
    %v2501 = vpack.c.bf16 %v2475, %v2473
    %v2502 = vpack.c.bf16 %v2476, %v2476
    %v2503 = vpack.c.bf16 %v2477, %v2477
    %v2504 = vld [vmem:[#allocation8] sm:$0xf]
    %v2505 = vld [vmem:[#allocation8 + $0x4] sm:$0xf]
    %v2506 = vld [vmem:[#allocation8 + $0x8] sm:$0xf]
    %v2507 = vld [vmem:[#allocation8 + $0xc] sm:$0xf]
    %v2508 = vld [vmem:[#allocation8 + $0x10] sm:$0xf]
    %v2509 = vld [vmem:[#allocation8 + $0x14] sm:$0xf]
    %v2510 = vld [vmem:[#allocation8 + $0x18] sm:$0xf]
    %v2511 = vld [vmem:[#allocation8 + $0x1c] sm:$0xf]
    %v2512 = vld [vmem:[#allocation8 + $0x20] sm:$0xf]
    %v2513 = vld [vmem:[#allocation8 + $0x24] sm:$0xf]
    %v2514 = vld [vmem:[#allocation8 + $0x28] sm:$0xf]
    %v2515 = vld [vmem:[#allocation8 + $0x2c] sm:$0xf]
    %v2516 = vld [vmem:[#allocation8 + $0x30] sm:$0xf]
    %v2517 = vld [vmem:[#allocation8 + $0x34] sm:$0xf]
    %v2518 = vld [vmem:[#allocation8 + $0x38] sm:$0xf]
    %v2519 = vld [vmem:[#allocation8 + $0x3c] sm:$0xf]
    %v2520 = vld [vmem:[#allocation8 + $0x40] sm:$0xf]
    %v2521 = vld [vmem:[#allocation8 + $0x44] sm:$0xf]
    %v2522 = vld [vmem:[#allocation8 + $0x48] sm:$0xf]
    %v2523 = vld [vmem:[#allocation8 + $0x4c] sm:$0xf]
    %v2524 = vld [vmem:[#allocation8 + $0x50] sm:$0xf]
    %v2525 = vld [vmem:[#allocation8 + $0x54] sm:$0xf]
    %v2526 = vld [vmem:[#allocation8 + $0x58] sm:$0xf]
    %v2527 = vld [vmem:[#allocation8 + $0x5c] sm:$0xf]
    %v2528 = vld [vmem:[#allocation8 + $0x60] sm:$0xf]
    %v2529 = vld [vmem:[#allocation8 + $0x64] sm:$0xf]
    %v2530 = vld [vmem:[#allocation8 + $0x68] sm:$0xf]
    %v2531 = vld [vmem:[#allocation8 + $0x6c] sm:$0xf]
    %v2532 = vld [vmem:[#allocation8 + $0x70] sm:$0xf]
    %v2533 = vld [vmem:[#allocation8 + $0x74] sm:$0xf]
    %v2534 = vld [vmem:[#allocation8 + $0x78] sm:$0xf]
    %v2535 = vld [vmem:[#allocation8 + $0x7c] sm:$0xf]
    %v2536 = vld [vmem:[%s4] sm:$0x1]
    %v2538 = vperm.slane %v2536, 0
    %v2572 = vunpack.c.l.b16 %v2504
    %v2573 = vunpack.c.l.b16 %v2505
    %v2574 = vunpack.c.l.b16 %v2506
    %v2575 = vunpack.c.l.b16 %v2507
    %v2576 = vunpack.c.l.b16 %v2508
    %v2577 = vunpack.c.l.b16 %v2509
    %v2578 = vunpack.c.l.b16 %v2510
    %v2579 = vunpack.c.l.b16 %v2511
    %v2580 = vunpack.c.l.b16 %v2512
    %v2581 = vunpack.c.l.b16 %v2513
    %v2582 = vunpack.c.l.b16 %v2514
    %v2583 = vunpack.c.l.b16 %v2515
    %v2584 = vunpack.c.l.b16 %v2516
    %v2585 = vunpack.c.l.b16 %v2517
    %v2586 = vunpack.c.l.b16 %v2518
    %v2587 = vunpack.c.l.b16 %v2519
    %v2588 = vunpack.c.l.b16 %v2520
    %v2589 = vunpack.c.l.b16 %v2521
    %v2590 = vunpack.c.l.b16 %v2522
    %v2591 = vunpack.c.l.b16 %v2523
    %v2592 = vunpack.c.l.b16 %v2524
    %v2593 = vunpack.c.l.b16 %v2525
    %v2594 = vunpack.c.l.b16 %v2526
    %v2595 = vunpack.c.l.b16 %v2527
    %v2596 = vunpack.c.l.b16 %v2528
    %v2597 = vunpack.c.l.b16 %v2529
    %v2598 = vunpack.c.l.b16 %v2530
    %v2599 = vunpack.c.l.b16 %v2531
    %v2600 = vunpack.c.l.b16 %v2532
    %v2601 = vunpack.c.l.b16 %v2533
    %v2602 = vunpack.c.l.b16 %v2534
    %v2603 = vunpack.c.l.b16 %v2535
    %v2604 = vpack.c.b16 %v2573, %v2572
    %v2605 = vpack.c.b16 %v2575, %v2574
    %v2606 = vpack.c.b16 %v2577, %v2576
    %v2607 = vpack.c.b16 %v2579, %v2578
    %v2608 = vpack.c.b16 %v2581, %v2580
    %v2609 = vpack.c.b16 %v2583, %v2582
    %v2610 = vpack.c.b16 %v2585, %v2584
    %v2611 = vpack.c.b16 %v2587, %v2586
    %v2612 = vpack.c.b16 %v2589, %v2588
    %v2613 = vpack.c.b16 %v2591, %v2590
    %v2614 = vpack.c.b16 %v2593, %v2592
    %v2615 = vpack.c.b16 %v2595, %v2594
    %v2616 = vpack.c.b16 %v2597, %v2596
    %v2617 = vpack.c.b16 %v2599, %v2598
    %v2618 = vpack.c.b16 %v2601, %v2600
    %v2619 = vpack.c.b16 %v2603, %v2602
    %2636 = vmatpush.bf16.msra.mxu0 %v2611
    %2637 = vmatpush.bf16.msra.mxu0 %v2610
    %2638 = vmatpush.bf16.msra.mxu0 %v2609
    %2639 = vmatpush.bf16.msra.mxu0 %v2608
    %2640 = vmatpush.bf16.msra.mxu0 %v2607
    %2641 = vmatpush.bf16.msra.mxu0 %v2606
    %2642 = vmatpush.bf16.msra.mxu0 %v2605
    %2643 = vmatpush.bf16.msra.mxu0 %v2604
    %2644 = vmatmul.bf16.gmra.mxu0 %v2478
    %v2645 = vpop.f32.mrf.mxu0
    %v2646 = vadd.f32 %v2538, %v2645
    %v2647 = vpop.f32.mrf.mxu0
    %v2648 = vadd.f32 %v2538, %v2647
    %2649 = vmatmul.bf16.gmra.mxu0 %v2480
    %v2650 = vpop.f32.mrf.mxu0
    %v2651 = vadd.f32 %v2538, %v2650
    %v2652 = vpop.f32.mrf.mxu0
    %v2653 = vadd.f32 %v2538, %v2652
    %2654 = vmatmul.bf16.gmra.mxu0 %v2482
    %v2655 = vpop.f32.mrf.mxu0
    %v2656 = vadd.f32 %v2538, %v2655
    %v2657 = vpop.f32.mrf.mxu0
    %v2658 = vadd.f32 %v2538, %v2657
    %2659 = vmatmul.bf16.gmra.mxu0 %v2484
    %v2660 = vpop.f32.mrf.mxu0
    %v2661 = vadd.f32 %v2538, %v2660
    %v2662 = vpop.f32.mrf.mxu0
    %v2663 = vadd.f32 %v2538, %v2662
    %2664 = vmatmul.bf16.gmra.mxu0 %v2486
    %v2665 = vpop.f32.mrf.mxu0
    %v2666 = vadd.f32 %v2538, %v2665
    %v2667 = vpop.f32.mrf.mxu0
    %v2668 = vadd.f32 %v2538, %v2667
    %2669 = vmatmul.bf16.gmra.mxu0 %v2488
    %v2670 = vpop.f32.mrf.mxu0
    %v2671 = vadd.f32 %v2538, %v2670
    %v2672 = vpop.f32.mrf.mxu0
    %v2673 = vadd.f32 %v2538, %v2672
    %2674 = vmatmul.bf16.gmra.mxu0 %v2490
    %v2675 = vpop.f32.mrf.mxu0
    %v2676 = vadd.f32 %v2538, %v2675
    %v2677 = vpop.f32.mrf.mxu0
    %v2678 = vadd.f32 %v2538, %v2677
    %2679 = vmatmul.bf16.gmra.mxu0 %v2492
    %v2680 = vpop.f32.mrf.mxu0
    %v2681 = vadd.f32 %v2538, %v2680
    %v2682 = vpop.f32.mrf.mxu0
    %v2683 = vadd.f32 %v2538, %v2682
    %2684 = vmatmul.bf16.gmra.mxu0 %v2494
    %v2685 = vpop.f32.mrf.mxu0
    %v2686 = vadd.f32 %v2538, %v2685
    %v2687 = vpop.f32.mrf.mxu0
    %v2688 = vadd.f32 %v2538, %v2687
    %2689 = vmatmul.bf16.gmra.mxu0 %v2496
    %v2690 = vpop.f32.mrf.mxu0
    %v2691 = vadd.f32 %v2538, %v2690
    %v2692 = vpop.f32.mrf.mxu0
    %v2693 = vadd.f32 %v2538, %v2692
    %2694 = vmatmul.bf16.gmra.mxu0 %v2498
    %v2695 = vpop.f32.mrf.mxu0
    %v2696 = vadd.f32 %v2538, %v2695
    %v2697 = vpop.f32.mrf.mxu0
    %v2698 = vadd.f32 %v2538, %v2697
    %2699 = vmatmul.bf16.gmra.mxu0 %v2500
    %v2700 = vpop.f32.mrf.mxu0
    %v2701 = vadd.f32 %v2538, %v2700
    %v2702 = vpop.f32.mrf.mxu0
    %v2703 = vadd.f32 %v2538, %v2702
    %2704 = vmatmul.bf16.gmra.mxu0 %v2502
    %v2705 = vpop.f32.mrf.mxu0
    %v2706 = vadd.f32 %v2538, %v2705
    %v2707 = vpop.f32.mrf.mxu0
    %2708 = vdwg.mxu0
    %2709 = vmatpush.bf16.msra.mxu0 %v2619
    %2710 = vmatpush.bf16.msra.mxu0 %v2618
    %2711 = vmatpush.bf16.msra.mxu0 %v2617
    %2712 = vmatpush.bf16.msra.mxu0 %v2616
    %2713 = vmatpush.bf16.msra.mxu0 %v2615
    %2714 = vmatpush.bf16.msra.mxu0 %v2614
    %2715 = vmatpush.bf16.msra.mxu0 %v2613
    %2716 = vmatpush.bf16.msra.mxu0 %v2612
    %2717 = vmatmul.bf16.gmra.mxu0 %v2479
    %v2718 = vpop.f32.mrf.mxu0
    %v2719 = vadd.f32 %v2646, %v2718
    %v2720 = vpop.f32.mrf.mxu0
    %v2721 = vadd.f32 %v2648, %v2720
    %2722 = vmatmul.bf16.gmra.mxu0 %v2481
    %v2723 = vpop.f32.mrf.mxu0
    %v2724 = vadd.f32 %v2651, %v2723
    %v2725 = vpop.f32.mrf.mxu0
    %v2726 = vadd.f32 %v2653, %v2725
    %2727 = vmatmul.bf16.gmra.mxu0 %v2483
    %v2728 = vpop.f32.mrf.mxu0
    %v2729 = vadd.f32 %v2656, %v2728
    %v2730 = vpop.f32.mrf.mxu0
    %v2731 = vadd.f32 %v2658, %v2730
    %2732 = vmatmul.bf16.gmra.mxu0 %v2485
    %v2733 = vpop.f32.mrf.mxu0
    %v2734 = vadd.f32 %v2661, %v2733
    %v2735 = vpop.f32.mrf.mxu0
    %v2736 = vadd.f32 %v2663, %v2735
    %2737 = vmatmul.bf16.gmra.mxu0 %v2487
    %v2738 = vpop.f32.mrf.mxu0
    %v2739 = vadd.f32 %v2666, %v2738
    %v2740 = vpop.f32.mrf.mxu0
    %v2741 = vadd.f32 %v2668, %v2740
    %2742 = vmatmul.bf16.gmra.mxu0 %v2489
    %v2743 = vpop.f32.mrf.mxu0
    %v2744 = vadd.f32 %v2671, %v2743
    %v2745 = vpop.f32.mrf.mxu0
    %v2746 = vadd.f32 %v2673, %v2745
    %2747 = vmatmul.bf16.gmra.mxu0 %v2491
    %v2748 = vpop.f32.mrf.mxu0
    %v2749 = vadd.f32 %v2676, %v2748
    %v2750 = vpop.f32.mrf.mxu0
    %v2751 = vadd.f32 %v2678, %v2750
    %2752 = vmatmul.bf16.gmra.mxu0 %v2493
    %v2753 = vpop.f32.mrf.mxu0
    %v2754 = vadd.f32 %v2681, %v2753
    %v2755 = vpop.f32.mrf.mxu0
    %v2756 = vadd.f32 %v2683, %v2755
    %2757 = vmatmul.bf16.gmra.mxu0 %v2495
    %v2758 = vpop.f32.mrf.mxu0
    %v2759 = vadd.f32 %v2686, %v2758
    %v2760 = vpop.f32.mrf.mxu0
    %v2761 = vadd.f32 %v2688, %v2760
    %2762 = vmatmul.bf16.gmra.mxu0 %v2497
    %v2763 = vpop.f32.mrf.mxu0
    %v2764 = vadd.f32 %v2691, %v2763
    %v2765 = vpop.f32.mrf.mxu0
    %v2766 = vadd.f32 %v2693, %v2765
    %2767 = vmatmul.bf16.gmra.mxu0 %v2499
    %v2768 = vpop.f32.mrf.mxu0
    %v2769 = vadd.f32 %v2696, %v2768
    %v2770 = vpop.f32.mrf.mxu0
    %v2771 = vadd.f32 %v2698, %v2770
    %2772 = vmatmul.bf16.gmra.mxu0 %v2501
    %v2773 = vpop.f32.mrf.mxu0
    %v2774 = vadd.f32 %v2701, %v2773
    %v2775 = vpop.f32.mrf.mxu0
    %v2776 = vadd.f32 %v2703, %v2775
    %2777 = vmatmul.bf16.gmra.mxu0 %v2503
    %v2778 = vpop.f32.mrf.mxu0
    %v2779 = vadd.f32 %v2706, %v2778
    %v2780 = vpop.f32.mrf.mxu0
    %2781 = vdwg.mxu0
    %2782 = vmax.xlane.f32.xlu0 %v2719
    %v2783 = vpop.xlane.xlu0 %2782
    %2784 = vmax.xlane.f32.xlu0 %v2721
    %v2785 = vpop.xlane.xlu0 %2784
    %2786 = vmax.xlane.f32.xlu0 %v2724
    %v2787 = vpop.xlane.xlu0 %2786
    %2788 = vmax.xlane.f32.xlu0 %v2726
    %v2789 = vpop.xlane.xlu0 %2788
    %2790 = vmax.xlane.f32.xlu0 %v2729
    %v2791 = vpop.xlane.xlu0 %2790
    %2792 = vmax.xlane.f32.xlu0 %v2731
    %v2793 = vpop.xlane.xlu0 %2792
    %2794 = vmax.xlane.f32.xlu0 %v2734
    %v2795 = vpop.xlane.xlu0 %2794
    %2796 = vmax.xlane.f32.xlu0 %v2736
    %v2797 = vpop.xlane.xlu0 %2796
    %2798 = vmax.xlane.f32.xlu0 %v2739
    %v2799 = vpop.xlane.xlu0 %2798
    %2800 = vmax.xlane.f32.xlu0 %v2741
    %v2801 = vpop.xlane.xlu0 %2800
    %2802 = vmax.xlane.f32.xlu0 %v2744
    %v2803 = vpop.xlane.xlu0 %2802
    %2804 = vmax.xlane.f32.xlu0 %v2746
    %v2805 = vpop.xlane.xlu0 %2804
    %2806 = vmax.xlane.f32.xlu0 %v2749
    %v2807 = vpop.xlane.xlu0 %2806
    %2808 = vmax.xlane.f32.xlu0 %v2751
    %v2809 = vpop.xlane.xlu0 %2808
    %2810 = vmax.xlane.f32.xlu0 %v2754
    %v2811 = vpop.xlane.xlu0 %2810
    %2812 = vmax.xlane.f32.xlu0 %v2756
    %v2813 = vpop.xlane.xlu0 %2812
    %2814 = vmax.xlane.f32.xlu0 %v2759
    %v2815 = vpop.xlane.xlu0 %2814
    %2816 = vmax.xlane.f32.xlu0 %v2761
    %v2817 = vpop.xlane.xlu0 %2816
    %2818 = vmax.xlane.f32.xlu0 %v2764
    %v2819 = vpop.xlane.xlu0 %2818
    %2820 = vmax.xlane.f32.xlu0 %v2766
    %v2821 = vpop.xlane.xlu0 %2820
    %2822 = vmax.xlane.f32.xlu0 %v2769
    %v2823 = vpop.xlane.xlu0 %2822
    %2824 = vmax.xlane.f32.xlu0 %v2771
    %v2825 = vpop.xlane.xlu0 %2824
    %2826 = vmax.xlane.f32.xlu0 %v2774
    %v2827 = vpop.xlane.xlu0 %2826
    %2828 = vmax.xlane.f32.xlu0 %v2776
    %v2829 = vpop.xlane.xlu0 %2828
    %2830 = vmax.xlane.f32.xlu0 %v2779
    %v2831 = vpop.xlane.xlu0 %2830
    %v2832 = vsub.f32 %v2719, %v2783
    %v2833 = vsub.f32 %v2721, %v2785
    %v2834 = vsub.f32 %v2724, %v2787
    %v2835 = vsub.f32 %v2726, %v2789
    %v2836 = vsub.f32 %v2729, %v2791
    %v2837 = vsub.f32 %v2731, %v2793
    %v2838 = vsub.f32 %v2734, %v2795
    %v2839 = vsub.f32 %v2736, %v2797
    %v2840 = vsub.f32 %v2739, %v2799
    %v2841 = vsub.f32 %v2741, %v2801
    %v2842 = vsub.f32 %v2744, %v2803
    %v2843 = vsub.f32 %v2746, %v2805
    %v2844 = vsub.f32 %v2749, %v2807
    %v2845 = vsub.f32 %v2751, %v2809
    %v2846 = vsub.f32 %v2754, %v2811
    %v2847 = vsub.f32 %v2756, %v2813
    %v2848 = vsub.f32 %v2759, %v2815
    %v2849 = vsub.f32 %v2761, %v2817
    %v2850 = vsub.f32 %v2764, %v2819
    %v2851 = vsub.f32 %v2766, %v2821
    %v2852 = vsub.f32 %v2769, %v2823
    %v2853 = vsub.f32 %v2771, %v2825
    %v2854 = vsub.f32 %v2774, %v2827
    %v2855 = vsub.f32 %v2776, %v2829
    %v2856 = vsub.f32 %v2779, %v2831
    %v2857 = vmul.f32 %v2832, 1.442695
    %v2858 = vpow.pop %v2857
    %v2859 = vmul.f32 %v2833, 1.442695
    %v2860 = vpow.pop %v2859
    %v2861 = vmul.f32 %v2834, 1.442695
    %v2862 = vpow.pop %v2861
    %v2863 = vmul.f32 %v2835, 1.442695
    %v2864 = vpow.pop %v2863
    %v2865 = vmul.f32 %v2836, 1.442695
    %v2866 = vpow.pop %v2865
    %v2867 = vmul.f32 %v2837, 1.442695
    %v2868 = vpow.pop %v2867
    %v2869 = vmul.f32 %v2838, 1.442695
    %v2870 = vpow.pop %v2869
    %v2871 = vmul.f32 %v2839, 1.442695
    %v2872 = vpow.pop %v2871
    %v2873 = vmul.f32 %v2840, 1.442695
    %v2874 = vpow.pop %v2873
    %v2875 = vmul.f32 %v2841, 1.442695
    %v2876 = vpow.pop %v2875
    %v2877 = vmul.f32 %v2842, 1.442695
    %v2878 = vpow.pop %v2877
    %v2879 = vmul.f32 %v2843, 1.442695
    %v2880 = vpow.pop %v2879
    %v2881 = vmul.f32 %v2844, 1.442695
    %v2882 = vpow.pop %v2881
    %v2883 = vmul.f32 %v2845, 1.442695
    %v2884 = vpow.pop %v2883
    %v2885 = vmul.f32 %v2846, 1.442695
    %v2886 = vpow.pop %v2885
    %v2887 = vmul.f32 %v2847, 1.442695
    %v2888 = vpow.pop %v2887
    %v2889 = vmul.f32 %v2848, 1.442695
    %v2890 = vpow.pop %v2889
    %v2891 = vmul.f32 %v2849, 1.442695
    %v2892 = vpow.pop %v2891
    %v2893 = vmul.f32 %v2850, 1.442695
    %v2894 = vpow.pop %v2893
    %v2895 = vmul.f32 %v2851, 1.442695
    %v2896 = vpow.pop %v2895
    %v2897 = vmul.f32 %v2852, 1.442695
    %v2898 = vpow.pop %v2897
    %v2899 = vmul.f32 %v2853, 1.442695
    %v2900 = vpow.pop %v2899
    %v2901 = vmul.f32 %v2854, 1.442695
    %v2902 = vpow.pop %v2901
    %v2903 = vmul.f32 %v2855, 1.442695
    %v2904 = vpow.pop %v2903
    %v2905 = vmul.f32 %v2856, 1.442695
    %v2906 = vpow.pop %v2905
    %2907 = vadd.xlane.f32.xlu0 %v2858
    %v2908 = vpop.xlane.xlu0 %2907
    %2909 = vadd.xlane.f32.xlu0 %v2860
    %v2910 = vpop.xlane.xlu0 %2909
    %2911 = vadd.xlane.f32.xlu0 %v2862
    %v2912 = vpop.xlane.xlu0 %2911
    %2913 = vadd.xlane.f32.xlu0 %v2864
    %v2914 = vpop.xlane.xlu0 %2913
    %2915 = vadd.xlane.f32.xlu0 %v2866
    %v2916 = vpop.xlane.xlu0 %2915
    %2917 = vadd.xlane.f32.xlu0 %v2868
    %v2918 = vpop.xlane.xlu0 %2917
    %2919 = vadd.xlane.f32.xlu0 %v2870
    %v2920 = vpop.xlane.xlu0 %2919
    %2921 = vadd.xlane.f32.xlu0 %v2872
    %v2922 = vpop.xlane.xlu0 %2921
    %2923 = vadd.xlane.f32.xlu0 %v2874
    %v2924 = vpop.xlane.xlu0 %2923
    %2925 = vadd.xlane.f32.xlu0 %v2876
    %v2926 = vpop.xlane.xlu0 %2925
    %2927 = vadd.xlane.f32.xlu0 %v2878
    %v2928 = vpop.xlane.xlu0 %2927
    %2929 = vadd.xlane.f32.xlu0 %v2880
    %v2930 = vpop.xlane.xlu0 %2929
    %2931 = vadd.xlane.f32.xlu0 %v2882
    %v2932 = vpop.xlane.xlu0 %2931
    %2933 = vadd.xlane.f32.xlu0 %v2884
    %v2934 = vpop.xlane.xlu0 %2933
    %2935 = vadd.xlane.f32.xlu0 %v2886
    %v2936 = vpop.xlane.xlu0 %2935
    %2937 = vadd.xlane.f32.xlu0 %v2888
    %v2938 = vpop.xlane.xlu0 %2937
    %2939 = vadd.xlane.f32.xlu0 %v2890
    %v2940 = vpop.xlane.xlu0 %2939
    %2941 = vadd.xlane.f32.xlu0 %v2892
    %v2942 = vpop.xlane.xlu0 %2941
    %2943 = vadd.xlane.f32.xlu0 %v2894
    %v2944 = vpop.xlane.xlu0 %2943
    %2945 = vadd.xlane.f32.xlu0 %v2896
    %v2946 = vpop.xlane.xlu0 %2945
    %2947 = vadd.xlane.f32.xlu0 %v2898
    %v2948 = vpop.xlane.xlu0 %2947
    %2949 = vadd.xlane.f32.xlu0 %v2900
    %v2950 = vpop.xlane.xlu0 %2949
    %2951 = vadd.xlane.f32.xlu0 %v2902
    %v2952 = vpop.xlane.xlu0 %2951
    %2953 = vadd.xlane.f32.xlu0 %v2904
    %v2954 = vpop.xlane.xlu0 %2953
    %2955 = vadd.xlane.f32.xlu0 %v2906
    %v2956 = vpop.xlane.xlu0 %2955
    %v2957 = vlog2.pop %v2908
    %v2958 = vmul.f32 %v2957, 0.6931472
    %v2959 = vlog2.pop %v2910
    %v2960 = vmul.f32 %v2959, 0.6931472
    %v2961 = vlog2.pop %v2912
    %v2962 = vmul.f32 %v2961, 0.6931472
    %v2963 = vlog2.pop %v2914
    %v2964 = vmul.f32 %v2963, 0.6931472
    %v2965 = vlog2.pop %v2916
    %v2966 = vmul.f32 %v2965, 0.6931472
    %v2967 = vlog2.pop %v2918
    %v2968 = vmul.f32 %v2967, 0.6931472
    %v2969 = vlog2.pop %v2920
    %v2970 = vmul.f32 %v2969, 0.6931472
    %v2971 = vlog2.pop %v2922
    %v2972 = vmul.f32 %v2971, 0.6931472
    %v2973 = vlog2.pop %v2924
    %v2974 = vmul.f32 %v2973, 0.6931472
    %v2975 = vlog2.pop %v2926
    %v2976 = vmul.f32 %v2975, 0.6931472
    %v2977 = vlog2.pop %v2928
    %v2978 = vmul.f32 %v2977, 0.6931472
    %v2979 = vlog2.pop %v2930
    %v2980 = vmul.f32 %v2979, 0.6931472
    %v2981 = vlog2.pop %v2932
    %v2982 = vmul.f32 %v2981, 0.6931472
    %v2983 = vlog2.pop %v2934
    %v2984 = vmul.f32 %v2983, 0.6931472
    %v2985 = vlog2.pop %v2936
    %v2986 = vmul.f32 %v2985, 0.6931472
    %v2987 = vlog2.pop %v2938
    %v2988 = vmul.f32 %v2987, 0.6931472
    %v2989 = vlog2.pop %v2940
    %v2990 = vmul.f32 %v2989, 0.6931472
    %v2991 = vlog2.pop %v2942
    %v2992 = vmul.f32 %v2991, 0.6931472
    %v2993 = vlog2.pop %v2944
    %v2994 = vmul.f32 %v2993, 0.6931472
    %v2995 = vlog2.pop %v2946
    %v2996 = vmul.f32 %v2995, 0.6931472
    %v2997 = vlog2.pop %v2948
    %v2998 = vmul.f32 %v2997, 0.6931472
    %v2999 = vlog2.pop %v2950
    %v3000 = vmul.f32 %v2999, 0.6931472
    %v3001 = vlog2.pop %v2952
    %v3002 = vmul.f32 %v3001, 0.6931472
    %v3003 = vlog2.pop %v2954
    %v3004 = vmul.f32 %v3003, 0.6931472
    %v3005 = vlog2.pop %v2956
    %v3006 = vmul.f32 %v3005, 0.6931472
    %v3007 = vsub.f32 %v2832, %v2958
    %v3008 = vsub.f32 %v2833, %v2960
    %v3009 = vsub.f32 %v2834, %v2962
    %v3010 = vsub.f32 %v2835, %v2964
    %v3011 = vsub.f32 %v2836, %v2966
    %v3012 = vsub.f32 %v2837, %v2968
    %v3013 = vsub.f32 %v2838, %v2970
    %v3014 = vsub.f32 %v2839, %v2972
    %v3015 = vsub.f32 %v2840, %v2974
    %v3016 = vsub.f32 %v2841, %v2976
    %v3017 = vsub.f32 %v2842, %v2978
    %v3018 = vsub.f32 %v2843, %v2980
    %v3019 = vsub.f32 %v2844, %v2982
    %v3020 = vsub.f32 %v2845, %v2984
    %v3021 = vsub.f32 %v2846, %v2986
    %v3022 = vsub.f32 %v2847, %v2988
    %v3023 = vsub.f32 %v2848, %v2990
    %v3024 = vsub.f32 %v2849, %v2992
    %v3025 = vsub.f32 %v2850, %v2994
    %v3026 = vsub.f32 %v2851, %v2996
    %v3027 = vsub.f32 %v2852, %v2998
    %v3028 = vsub.f32 %v2853, %v3000
    %v3029 = vsub.f32 %v2854, %v3002
    %v3030 = vsub.f32 %v2855, %v3004
    %v3031 = vsub.f32 %v2856, %v3006
    %3032 = vst [vmem:[#allocation10] sm:$0xff] %v3007
    %3033 = vst [vmem:[#allocation10 + $0x8] sm:$0xff] %v3008
    %3034 = vst [vmem:[#allocation10 + $0x10] sm:$0xff] %v3009
    %3035 = vst [vmem:[#allocation10 + $0x18] sm:$0xff] %v3010
    %3036 = vst [vmem:[#allocation10 + $0x20] sm:$0xff] %v3011
    %3037 = vst [vmem:[#allocation10 + $0x28] sm:$0xff] %v3012
    %3038 = vst [vmem:[#allocation10 + $0x30] sm:$0xff] %v3013
    %3039 = vst [vmem:[#allocation10 + $0x38] sm:$0xff] %v3014
    %3040 = vst [vmem:[#allocation10 + $0x40] sm:$0xff] %v3015
    %3041 = vst [vmem:[#allocation10 + $0x48] sm:$0xff] %v3016
    %3042 = vst [vmem:[#allocation10 + $0x50] sm:$0xff] %v3017
    %3043 = vst [vmem:[#allocation10 + $0x58] sm:$0xff] %v3018
    %3044 = vst [vmem:[#allocation10 + $0x60] sm:$0xff] %v3019
    %3045 = vst [vmem:[#allocation10 + $0x68] sm:$0xff] %v3020
    %3046 = vst [vmem:[#allocation10 + $0x70] sm:$0xff] %v3021
    %3047 = vst [vmem:[#allocation10 + $0x78] sm:$0xff] %v3022
    %3048 = vst [vmem:[#allocation10 + $0x80] sm:$0xff] %v3023
    %3049 = vst [vmem:[#allocation10 + $0x88] sm:$0xff] %v3024
    %3050 = vst [vmem:[#allocation10 + $0x90] sm:$0xff] %v3025
    %3051 = vst [vmem:[#allocation10 + $0x98] sm:$0xff] %v3026
    %3052 = vst [vmem:[#allocation10 + $0xa0] sm:$0xff] %v3027
    %3053 = vst [vmem:[#allocation10 + $0xa8] sm:$0xff] %v3028
    %3054 = vst [vmem:[#allocation10 + $0xb0] sm:$0xff] %v3029
    %3055 = vst [vmem:[#allocation10 + $0xb8] sm:$0xff] %v3030
    %3056 = vst [vmem:[#allocation10 + $0xc0] sm:$0xff] %v3031
    // Predicated region
    $region38: #{tpu_custom_call.1} parent=1 // pred_check
      _
    $region39: #{tpu_custom_call.1} parent=1 // pred_check_branch
      %3058 = sbr.rel (0) target = $region41
    $region40: #{tpu_custom_call.1} parent=1 // pred_region
      %3060 = vsyncadd [#allocation4], 0
      %s3061 = sshll.u32 [#allocation10], 4
      %s3062 = int_to_ptr.vmem [resolvable:$true] %s3061
      %s3063 = sshll.u32 %s5, 4
      %s3064 = int_to_ptr.hbm [resolvable:$true] %s3063
      %3069 = dma.vmem_to_hbm [thread:$0]  %s3062, 3200, %s3064, [#allocation4], 128, 128, 8
    $region41: #{tpu_custom_call.1} parent=1 // pred_fallthru
      _
    // Predicated region
    $region42: #{tpu_custom_call.1} parent=1 // pred_check
      _
    $region43: #{tpu_custom_call.1} parent=1 // pred_check_branch
      %3071 = sbr.rel (0) target = $region45
    $region44: #{tpu_custom_call.1} parent=1 // pred_region
      %3073 = dma.done [#allocation4], 3200
    $region45: #{tpu_custom_call.1} parent=1 // pred_fallthru
      _
    %3074 = vsyncpa [#allocation3], 1
    %3075 = vsyncpa [#allocation6], 1
    %3076 = vsyncpa [#allocation9], 1
    %3077 = vsyncpa [#allocation4], 1

</llo_original>
